<compile_context>
chip_gen: v7x
topology: tpu7x:2x2x1
jax: 0.10.0
libtpu: 0.0.40
codegen_flags: <defaults>
</compile_context>

<pallas_src>
import jax
import jax.numpy as jnp
import numpy as np
from jax.experimental import pallas as pl
from jax.experimental.pallas import tpu as pltpu


# ---------------------------------------------------------------------------
# Fused Pallas kernel (one grid step = one image)
# ---------------------------------------------------------------------------

def _make_upconv_kernel(H, W, Cin, Cskip, Cout):
    OH, OW = 2 * H, 2 * W
    LUP = Cin * OW          # up-channel lanes in the concat buffer  (= 64 here)
    NOUT = OW * Cout        # lane-dense slab width                  (= 128 here)

    def kernel(x_ref, skip_ref, wt_ref, bt_ref, w1_ref, b1_ref, w2_ref, b2_ref,
               o_ref, cat_ref, h1_ref):
        # x_ref   : (1, H, W*Cin)        row-slab of the low-res input (lane = j*Cin+ci)
        # skip_ref: (1, Cskip, OH, OW)   skip connection, NCHW as-is
        # wt_ref  : (2, W*Cin, LUP)      transposed-conv weights, one per row parity kh
        # bt_ref  : (1, LUP)
        # w1_ref  : (3, Ccat*OW, NOUT)   block-Toeplitz conv1 weights, one per dh
        # w2_ref  : (3, Cout*OW, NOUT)   block-Toeplitz conv2 weights, one per dh
        # o_ref   : (1, OH, NOUT)        lane-dense output slab (lane = w*Cout+co)
        # cat_ref : (OH+2, Ccat*OW)      VMEM scratch: padded-row concat buffer
        # h1_ref  : (OH+2, NOUT)         VMEM scratch: padded-row conv1 output

        # In-VMEM zero init supplies the 3x3 'same' ROW padding (column padding is
        # folded into the Toeplitz weights) -- no jnp.pad / HBM round trips.
        cat_ref[...] = jnp.zeros_like(cat_ref)
        h1_ref[...] = jnp.zeros_like(h1_ref)

        x_rows = x_ref[0]                                     # (H, W*Cin)

        # --- ConvTranspose2d(k=2, s=2): one matmul per output-row parity kh.
        #     up[i, c*OW + (2j+kw)] lands directly in the up-channel lanes of the
        #     concat buffer; the 2x2 scatter is just the row placement 1 + 2i + kh.
        for kh in range(2):
            up = jnp.dot(x_rows, wt_ref[kh],
                         preferred_element_type=jnp.float32) + bt_ref[...]
            for i in range(H):                                # static, unrolled
                r = 1 + 2 * i + kh
                cat_ref[r:r + 1, 0:LUP] = up[i:i + 1, :]

        # --- torch.cat(dim=1): skip channels copied into their lane blocks (VMEM only).
        for c in range(Cskip):
            lo = LUP + c * OW
            cat_ref[1:1 + OH, lo:lo + OW] = skip_ref[0, c, :, :]

        # --- conv1 3x3 'same' + ReLU: 3 row-slab matmuls (K=Ccat*OW, N=OW*Cout=128).
        acc = jnp.zeros((OH, NOUT), jnp.float32)
        for dh in range(3):
            acc = acc + jnp.dot(cat_ref[dh:dh + OH, :], w1_ref[dh],
                                preferred_element_type=jnp.float32)
        h1_ref[1:1 + OH, :] = jnp.maximum(acc + b1_ref[...], 0.0)   # lane-dense store

        # --- conv2 3x3 'same' + ReLU (h1 never leaves VMEM).
        acc2 = jnp.zeros((OH, NOUT), jnp.float32)
        for dh in range(3):
            acc2 = acc2 + jnp.dot(h1_ref[dh:dh + OH, :], w2_ref[dh],
                                  preferred_element_type=jnp.float32)
        o_ref[0, :, :] = jnp.maximum(acc2 + b2_ref[...], 0.0)       # (16, 128) store

    return kernel


# ---------------------------------------------------------------------------
# Host-side weight preparation (one-time, numpy)
# ---------------------------------------------------------------------------

def prepare_upconv_params(wt, bt, w1, b1, w2, b2, H, W):
    """Rearrange PyTorch-layout weights into row-slab / block-Toeplitz matrices."""
    wt = np.asarray(wt, np.float32)   # ConvTranspose2d: (Cin, Cin, 2, 2)
    bt = np.asarray(bt, np.float32)
    w1 = np.asarray(w1, np.float32)   # Conv2d: (Cout, Ccat, 3, 3)
    b1 = np.asarray(b1, np.float32)
    w2 = np.asarray(w2, np.float32)   # Conv2d: (Cout, Cout, 3, 3)
    b2 = np.asarray(b2, np.float32)

    Cin, Ct, KH, KW = wt.shape
    Cout, Ccat = w1.shape[0], w1.shape[1]
    OW = 2 * W

    # Transposed conv as two matmuls (one per output-row parity kh):
    #   up_rows_kh = x_rows @ Wt[kh] + bt_row
    # x_rows lane = j*Cin + ci ; output lane = c*OW + (2j + kw)
    Wt_mat = np.zeros((2, W * Cin, Ct * OW), np.float32)
    for kh in range(KH):
        for kw in range(KW):
            for j in range(W):
                for ci in range(Cin):
                    for c in range(Ct):
                        Wt_mat[kh, j * Cin + ci, c * OW + 2 * j + kw] = wt[ci, c, kh, kw]
    bt_row = np.repeat(bt, OW).reshape(1, Ct * OW)

    # 3x3 'same' convs as 3 block-Toeplitz matmuls (one per dh). Column ('same')
    # padding is encoded in the weight structure; row padding is physical zero
    # rows in the VMEM scratch buffers.
    def toeplitz(w, decode, n_in_lanes):
        Co = w.shape[0]
        Wb = np.zeros((3, n_in_lanes, OW * Co), np.float32)
        for dh in range(3):
            for lane in range(n_in_lanes):
                ci, wi = decode(lane)           # input channel, input column
                for wo in range(OW):            # output column
                    dw = wi - wo + 1
                    if 0 <= dw <= 2:
                        Wb[dh, lane, wo * Co:(wo + 1) * Co] = w[:, ci, dh, dw]
        return Wb

    # concat buffer lanes: ci*OW + w   (up channels 0..Cin-1, then skip channels)
    W1_mat = toeplitz(w1, lambda l: (l // OW, l % OW), Ccat * OW)
    # h1 buffer lanes: w*Cout + co     (as produced by conv1)
    W2_mat = toeplitz(w2, lambda l: (l % Cout, l // Cout), Cout * OW)
    b1_row = np.tile(b1, OW).reshape(1, OW * Cout)
    b2_row = np.tile(b2, OW).reshape(1, OW * Cout)

    return tuple(jnp.asarray(a) for a in
                 (Wt_mat, bt_row, W1_mat, b1_row, W2_mat, b2_row))


# ---------------------------------------------------------------------------
# Forward wrapper (only API-boundary layout glue lives in XLA)
# ---------------------------------------------------------------------------

def upconv_forward(x, x_skip, Wt_mat, bt_row, W1_mat, b1_row, W2_mat, b2_row):
    N, Cin, H, W = x.shape
    _, Cskip, OH, OW = x_skip.shape
    NOUT = W1_mat.shape[2]            # OW * Cout
    Cout = NOUT // OW
    LUP = Wt_mat.shape[2]             # Cin * OW
    LCAT = W1_mat.shape[1]            # (Cin + Cskip) * OW
    LH1 = W2_mat.shape[1]             # Cout * OW

    kernel = _make_upconv_kernel(H, W, Cin, Cskip, Cout)

    # x: NCHW -> per-row slab (lane = j*Cin + ci). skip goes in NCHW as-is.
    x_rows = jnp.transpose(x, (0, 2, 3, 1)).reshape(N, H, W * Cin)

    out = pl.pallas_call(
        kernel,
        out_shape=jax.ShapeDtypeStruct((N, OH, NOUT), jnp.float32),
        grid_spec=pltpu.PrefetchScalarGridSpec(
            num_scalar_prefetch=0,
            grid=(N,),
            in_specs=[
                pl.BlockSpec((1, H, W * Cin), lambda n: (n, 0, 0)),
                pl.BlockSpec((1, Cskip, OH, OW), lambda n: (n, 0, 0, 0)),
                pl.BlockSpec((2, W * Cin, LUP), lambda n: (0, 0, 0)),
                pl.BlockSpec((1, LUP), lambda n: (0, 0)),
                pl.BlockSpec((3, LCAT, NOUT), lambda n: (0, 0, 0)),
                pl.BlockSpec((1, NOUT), lambda n: (0, 0)),
                pl.BlockSpec((3, LH1, NOUT), lambda n: (0, 0, 0)),
                pl.BlockSpec((1, NOUT), lambda n: (0, 0)),
            ],
            out_specs=pl.BlockSpec((1, OH, NOUT), lambda n: (n, 0, 0)),
            scratch_shapes=[pltpu.VMEM((OH + 2, LCAT), jnp.float32),
                            pltpu.VMEM((OH + 2, LH1), jnp.float32)],
        ),
        compiler_params=pltpu.CompilerParams(
            dimension_semantics=("parallel",)),    # v7x: one image per TensorCore
    )(x_rows, x_skip, Wt_mat, bt_row, W1_mat, b1_row, W2_mat, b2_row)

    y = out.reshape(N, OH, OW, Cout)               # free: split the lane axis
    return jnp.transpose(y, (0, 3, 1, 2))          # back to NCHW (PyTorch API)


# ---------------------------------------------------------------------------
# Pure-JAX reference (for correctness check)
# ---------------------------------------------------------------------------

def reference_forward(x, x_skip, wt, bt, w1, b1, w2, b2):
    up = jnp.einsum("ncij,ckab->nkiajb", x, wt,
                    precision=jax.lax.Precision.HIGHEST)      # (N,C,H,2,W,2)
    N, C, H, _, W, _ = up.shape
    up = up.reshape(N, C, 2 * H, 2 * W) + bt[None, :, None, None]
    cat = jnp.concatenate([up, x_skip], axis=1)

    def conv(z, w, b):
        y = jax.lax.conv_general_dilated(
            z, w, (1, 1), ((1, 1), (1, 1)),
            dimension_numbers=("NCHW", "OIHW", "NCHW"),
            precision=jax.lax.Precision.HIGHEST)
        return jnp.maximum(y + b[None, :, None, None], 0.0)

    return conv(conv(cat, w1, b1), w2, b2)


# ---------------------------------------------------------------------------
# Main
# ---------------------------------------------------------------------------

if __name__ == "__main__":
    # UpConv(in_channels=4, in_channels_skip=4, out_channels=8,
    #        kernel_size=3, padding=1, stride=1)
    N, Cin, Cskip, Cout = 2, 4, 4, 8
    H = W = 8   # x is (N, Cin, 8, 8); after upsample spatial is 16x16

    keys = jax.random.split(jax.random.PRNGKey(0), 8)
    x = jax.random.normal(keys[0], (N, Cin, H, W), jnp.float32)
    x_skip = jax.random.normal(keys[1], (N, Cskip, 2 * H, 2 * W), jnp.float32)

    # deterministic synthetic parameters (PyTorch layouts)
    wt = 0.2 * jax.random.normal(keys[2], (Cin, Cin, 2, 2), jnp.float32)   # ConvTranspose2d: (in,out,kH,kW)
    bt = 0.1 * jax.random.normal(keys[3], (Cin,), jnp.float32)
    w1 = 0.2 * jax.random.normal(keys[4], (Cout, Cin + Cskip, 3, 3), jnp.float32)  # Conv2d: (out,in,kH,kW)
    b1 = 0.1 * jax.random.normal(keys[5], (Cout,), jnp.float32)
    w2 = 0.2 * jax.random.normal(keys[6], (Cout, Cout, 3, 3), jnp.float32)
    b2 = 0.1 * jax.random.normal(keys[7], (Cout,), jnp.float32)

    kparams = prepare_upconv_params(wt, bt, w1, b1, w2, b2, H, W)

    fwd = jax.jit(upconv_forward)
    out = fwd(x, x_skip, *kparams)
    out = jax.block_until_ready(out)

    ref = reference_forward(x, x_skip, wt, bt, w1, b1, w2, b2)
    np.testing.assert_allclose(np.asarray(out), np.asarray(ref),
                               rtol=1e-3, atol=1e-3)
    print("KERNEL_OK")
</pallas_src>

<mosaic_0001>
module attributes {stable_mosaic.version = 11 : i64} {
  func.func @kernel(%arg0: i32, %arg1: memref<1x8x32xf32, #tpu.memory_space<vmem>>, %arg2: memref<1x4x16x16xf32, #tpu.memory_space<vmem>>, %arg3: memref<2x32x64xf32, #tpu.memory_space<vmem>>, %arg4: memref<1x64xf32, #tpu.memory_space<vmem>>, %arg5: memref<3x128x128xf32, #tpu.memory_space<vmem>>, %arg6: memref<1x128xf32, #tpu.memory_space<vmem>>, %arg7: memref<3x128x128xf32, #tpu.memory_space<vmem>>, %arg8: memref<1x128xf32, #tpu.memory_space<vmem>>, %arg9: memref<1x16x128xf32, #tpu.memory_space<vmem>>, %arg10: memref<18x128xf32, #tpu.memory_space<vmem>>, %arg11: memref<18x128xf32, #tpu.memory_space<vmem>>) attributes {dimension_semantics = [#tpu.dimension_semantics<parallel>], iteration_bounds = array<i64: 2>, scalar_prefetch = 0 : i64, scratch_operands = 2 : i64, tpu.core_type = #tpu.core_type<tc>, window_params = [{transform_indices = @transform_0, window_bounds = array<i64: 1, 8, 32>}, {transform_indices = @transform_1, window_bounds = array<i64: 1, 4, 16, 16>}, {pipeline_mode = #tpu.pipeline_mode<synchronous>, transform_indices = @transform_2, window_bounds = array<i64: 2, 32, 64>}, {pipeline_mode = #tpu.pipeline_mode<synchronous>, transform_indices = @transform_3, window_bounds = array<i64: 1, 64>}, {pipeline_mode = #tpu.pipeline_mode<synchronous>, transform_indices = @transform_4, window_bounds = array<i64: 3, 128, 128>}, {pipeline_mode = #tpu.pipeline_mode<synchronous>, transform_indices = @transform_5, window_bounds = array<i64: 1, 128>}, {pipeline_mode = #tpu.pipeline_mode<synchronous>, transform_indices = @transform_6, window_bounds = array<i64: 3, 128, 128>}, {pipeline_mode = #tpu.pipeline_mode<synchronous>, transform_indices = @transform_7, window_bounds = array<i64: 1, 128>}, {transform_indices = @transform_8, window_bounds = array<i64: 1, 16, 128>}]} {
    %cst = arith.constant 0.000000e+00 : f32
    %0 = vector.broadcast %cst : f32 to vector<18x128xf32>
    %c0 = arith.constant 0 : index
    %c0_0 = arith.constant 0 : index
    %1 = vector.load %arg10[%c0, %c0_0] : memref<18x128xf32, #tpu.memory_space<vmem>>, vector<18x128xf32>
    tpu.vector_store %arg10[%c0, %c0_0], %0 {strides = array<i32>} : memref<18x128xf32, #tpu.memory_space<vmem>>, vector<18x128xf32>,
    %cst_1 = arith.constant 0.000000e+00 : f32
    %2 = vector.broadcast %cst_1 : f32 to vector<18x128xf32>
    %c0_2 = arith.constant 0 : index
    %c0_3 = arith.constant 0 : index
    %3 = vector.load %arg11[%c0_2, %c0_3] : memref<18x128xf32, #tpu.memory_space<vmem>>, vector<18x128xf32>
    tpu.vector_store %arg11[%c0_2, %c0_3], %2 {strides = array<i32>} : memref<18x128xf32, #tpu.memory_space<vmem>>, vector<18x128xf32>,
    %c0_4 = arith.constant 0 : index
    %c0_5 = arith.constant 0 : index
    %c0_6 = arith.constant 0 : index
    %4 = vector.load %arg1[%c0_4, %c0_5, %c0_6] : memref<1x8x32xf32, #tpu.memory_space<vmem>>, vector<1x8x32xf32>
    %5 = vector.shape_cast %4 : vector<1x8x32xf32> to vector<8x32xf32>
    %c0_7 = arith.constant 0 : index
    %c0_8 = arith.constant 0 : index
    %c0_9 = arith.constant 0 : index
    %6 = vector.load %arg3[%c0_7, %c0_8, %c0_9] : memref<2x32x64xf32, #tpu.memory_space<vmem>>, vector<1x32x64xf32>
    %7 = vector.shape_cast %6 : vector<1x32x64xf32> to vector<32x64xf32>
    %cst_10 = arith.constant dense<0.000000e+00> : vector<8x64xf32>
    %8 = tpu.matmul %5, %7, %cst_10 {dimension_numbers = #tpu.dot_dimension_numbers<[1], [0], [0], [1], [0, 0, 1, 1], [], []>} : vector<8x32xf32>, vector<32x64xf32>, vector<8x64xf32> -> vector<8x64xf32>
    %c0_11 = arith.constant 0 : index
    %c0_12 = arith.constant 0 : index
    %9 = vector.load %arg4[%c0_11, %c0_12] : memref<1x64xf32, #tpu.memory_space<vmem>>, vector<1x64xf32>
    %10 = vector.broadcast %9 : vector<1x64xf32> to vector<8x64xf32>
    %11 = arith.addf %8, %10 : vector<8x64xf32>
    %12 = vector.extract_strided_slice %11 {offsets = [0, 0], sizes = [1, 64], strides = [1, 1]} : vector<8x64xf32> to vector<1x64xf32>
    %c1 = arith.constant 1 : index
    %c0_13 = arith.constant 0 : index
    %13 = vector.load %arg10[%c1, %c0_13] : memref<18x128xf32, #tpu.memory_space<vmem>>, vector<1x64xf32>
    tpu.vector_store %arg10[%c1, %c0_13], %12 {strides = array<i32>} : memref<18x128xf32, #tpu.memory_space<vmem>>, vector<1x64xf32>,
    %14 = vector.extract_strided_slice %11 {offsets = [1, 0], sizes = [1, 64], strides = [1, 1]} : vector<8x64xf32> to vector<1x64xf32>
    %c3 = arith.constant 3 : index
    %c0_14 = arith.constant 0 : index
    %15 = vector.load %arg10[%c3, %c0_14] : memref<18x128xf32, #tpu.memory_space<vmem>>, vector<1x64xf32>
    tpu.vector_store %arg10[%c3, %c0_14], %14 {strides = array<i32>} : memref<18x128xf32, #tpu.memory_space<vmem>>, vector<1x64xf32>,
    %16 = vector.extract_strided_slice %11 {offsets = [2, 0], sizes = [1, 64], strides = [1, 1]} : vector<8x64xf32> to vector<1x64xf32>
    %c5 = arith.constant 5 : index
    %c0_15 = arith.constant 0 : index
    %17 = vector.load %arg10[%c5, %c0_15] : memref<18x128xf32, #tpu.memory_space<vmem>>, vector<1x64xf32>
    tpu.vector_store %arg10[%c5, %c0_15], %16 {strides = array<i32>} : memref<18x128xf32, #tpu.memory_space<vmem>>, vector<1x64xf32>,
    %18 = vector.extract_strided_slice %11 {offsets = [3, 0], sizes = [1, 64], strides = [1, 1]} : vector<8x64xf32> to vector<1x64xf32>
    %c7 = arith.constant 7 : index
    %c0_16 = arith.constant 0 : index
    %19 = vector.load %arg10[%c7, %c0_16] : memref<18x128xf32, #tpu.memory_space<vmem>>, vector<1x64xf32>
    tpu.vector_store %arg10[%c7, %c0_16], %18 {strides = array<i32>} : memref<18x128xf32, #tpu.memory_space<vmem>>, vector<1x64xf32>,
    %20 = vector.extract_strided_slice %11 {offsets = [4, 0], sizes = [1, 64], strides = [1, 1]} : vector<8x64xf32> to vector<1x64xf32>
    %c9 = arith.constant 9 : index
    %c0_17 = arith.constant 0 : index
    %21 = vector.load %arg10[%c9, %c0_17] : memref<18x128xf32, #tpu.memory_space<vmem>>, vector<1x64xf32>
    tpu.vector_store %arg10[%c9, %c0_17], %20 {strides = array<i32>} : memref<18x128xf32, #tpu.memory_space<vmem>>, vector<1x64xf32>,
    %22 = vector.extract_strided_slice %11 {offsets = [5, 0], sizes = [1, 64], strides = [1, 1]} : vector<8x64xf32> to vector<1x64xf32>
    %c11 = arith.constant 11 : index
    %c0_18 = arith.constant 0 : index
    %23 = vector.load %arg10[%c11, %c0_18] : memref<18x128xf32, #tpu.memory_space<vmem>>, vector<1x64xf32>
    tpu.vector_store %arg10[%c11, %c0_18], %22 {strides = array<i32>} : memref<18x128xf32, #tpu.memory_space<vmem>>, vector<1x64xf32>,
    %24 = vector.extract_strided_slice %11 {offsets = [6, 0], sizes = [1, 64], strides = [1, 1]} : vector<8x64xf32> to vector<1x64xf32>
    %c13 = arith.constant 13 : index
    %c0_19 = arith.constant 0 : index
    %25 = vector.load %arg10[%c13, %c0_19] : memref<18x128xf32, #tpu.memory_space<vmem>>, vector<1x64xf32>
    tpu.vector_store %arg10[%c13, %c0_19], %24 {strides = array<i32>} : memref<18x128xf32, #tpu.memory_space<vmem>>, vector<1x64xf32>,
    %26 = vector.extract_strided_slice %11 {offsets = [7, 0], sizes = [1, 64], strides = [1, 1]} : vector<8x64xf32> to vector<1x64xf32>
    %c15 = arith.constant 15 : index
    %c0_20 = arith.constant 0 : index
    %27 = vector.load %arg10[%c15, %c0_20] : memref<18x128xf32, #tpu.memory_space<vmem>>, vector<1x64xf32>
    tpu.vector_store %arg10[%c15, %c0_20], %26 {strides = array<i32>} : memref<18x128xf32, #tpu.memory_space<vmem>>, vector<1x64xf32>,
    %c1_21 = arith.constant 1 : index
    %c0_22 = arith.constant 0 : index
    %c0_23 = arith.constant 0 : index
    %28 = vector.load %arg3[%c1_21, %c0_22, %c0_23] : memref<2x32x64xf32, #tpu.memory_space<vmem>>, vector<1x32x64xf32>
    %29 = vector.shape_cast %28 : vector<1x32x64xf32> to vector<32x64xf32>
    %cst_24 = arith.constant dense<0.000000e+00> : vector<8x64xf32>
    %30 = tpu.matmul %5, %29, %cst_24 {dimension_numbers = #tpu.dot_dimension_numbers<[1], [0], [0], [1], [0, 0, 1, 1], [], []>} : vector<8x32xf32>, vector<32x64xf32>, vector<8x64xf32> -> vector<8x64xf32>
    %c0_25 = arith.constant 0 : index
    %c0_26 = arith.constant 0 : index
    %31 = vector.load %arg4[%c0_25, %c0_26] : memref<1x64xf32, #tpu.memory_space<vmem>>, vector<1x64xf32>
    %32 = vector.broadcast %31 : vector<1x64xf32> to vector<8x64xf32>
    %33 = arith.addf %30, %32 : vector<8x64xf32>
    %34 = vector.extract_strided_slice %33 {offsets = [0, 0], sizes = [1, 64], strides = [1, 1]} : vector<8x64xf32> to vector<1x64xf32>
    %c2 = arith.constant 2 : index
    %c0_27 = arith.constant 0 : index
    %35 = vector.load %arg10[%c2, %c0_27] : memref<18x128xf32, #tpu.memory_space<vmem>>, vector<1x64xf32>
    tpu.vector_store %arg10[%c2, %c0_27], %34 {strides = array<i32>} : memref<18x128xf32, #tpu.memory_space<vmem>>, vector<1x64xf32>,
    %36 = vector.extract_strided_slice %33 {offsets = [1, 0], sizes = [1, 64], strides = [1, 1]} : vector<8x64xf32> to vector<1x64xf32>
    %c4 = arith.constant 4 : index
    %c0_28 = arith.constant 0 : index
    %37 = vector.load %arg10[%c4, %c0_28] : memref<18x128xf32, #tpu.memory_space<vmem>>, vector<1x64xf32>
    tpu.vector_store %arg10[%c4, %c0_28], %36 {strides = array<i32>} : memref<18x128xf32, #tpu.memory_space<vmem>>, vector<1x64xf32>,
    %38 = vector.extract_strided_slice %33 {offsets = [2, 0], sizes = [1, 64], strides = [1, 1]} : vector<8x64xf32> to vector<1x64xf32>
    %c6 = arith.constant 6 : index
    %c0_29 = arith.constant 0 : index
    %39 = vector.load %arg10[%c6, %c0_29] : memref<18x128xf32, #tpu.memory_space<vmem>>, vector<1x64xf32>
    tpu.vector_store %arg10[%c6, %c0_29], %38 {strides = array<i32>} : memref<18x128xf32, #tpu.memory_space<vmem>>, vector<1x64xf32>,
    %40 = vector.extract_strided_slice %33 {offsets = [3, 0], sizes = [1, 64], strides = [1, 1]} : vector<8x64xf32> to vector<1x64xf32>
    %c8 = arith.constant 8 : index
    %c0_30 = arith.constant 0 : index
    %41 = vector.load %arg10[%c8, %c0_30] : memref<18x128xf32, #tpu.memory_space<vmem>>, vector<1x64xf32>
    tpu.vector_store %arg10[%c8, %c0_30], %40 {strides = array<i32>} : memref<18x128xf32, #tpu.memory_space<vmem>>, vector<1x64xf32>,
    %42 = vector.extract_strided_slice %33 {offsets = [4, 0], sizes = [1, 64], strides = [1, 1]} : vector<8x64xf32> to vector<1x64xf32>
    %c10 = arith.constant 10 : index
    %c0_31 = arith.constant 0 : index
    %43 = vector.load %arg10[%c10, %c0_31] : memref<18x128xf32, #tpu.memory_space<vmem>>, vector<1x64xf32>
    tpu.vector_store %arg10[%c10, %c0_31], %42 {strides = array<i32>} : memref<18x128xf32, #tpu.memory_space<vmem>>, vector<1x64xf32>,
    %44 = vector.extract_strided_slice %33 {offsets = [5, 0], sizes = [1, 64], strides = [1, 1]} : vector<8x64xf32> to vector<1x64xf32>
    %c12 = arith.constant 12 : index
    %c0_32 = arith.constant 0 : index
    %45 = vector.load %arg10[%c12, %c0_32] : memref<18x128xf32, #tpu.memory_space<vmem>>, vector<1x64xf32>
    tpu.vector_store %arg10[%c12, %c0_32], %44 {strides = array<i32>} : memref<18x128xf32, #tpu.memory_space<vmem>>, vector<1x64xf32>,
    %46 = vector.extract_strided_slice %33 {offsets = [6, 0], sizes = [1, 64], strides = [1, 1]} : vector<8x64xf32> to vector<1x64xf32>
    %c14 = arith.constant 14 : index
    %c0_33 = arith.constant 0 : index
    %47 = vector.load %arg10[%c14, %c0_33] : memref<18x128xf32, #tpu.memory_space<vmem>>, vector<1x64xf32>
    tpu.vector_store %arg10[%c14, %c0_33], %46 {strides = array<i32>} : memref<18x128xf32, #tpu.memory_space<vmem>>, vector<1x64xf32>,
    %48 = vector.extract_strided_slice %33 {offsets = [7, 0], sizes = [1, 64], strides = [1, 1]} : vector<8x64xf32> to vector<1x64xf32>
    %c16 = arith.constant 16 : index
    %c0_34 = arith.constant 0 : index
    %49 = vector.load %arg10[%c16, %c0_34] : memref<18x128xf32, #tpu.memory_space<vmem>>, vector<1x64xf32>
    tpu.vector_store %arg10[%c16, %c0_34], %48 {strides = array<i32>} : memref<18x128xf32, #tpu.memory_space<vmem>>, vector<1x64xf32>,
    %c0_35 = arith.constant 0 : index
    %c0_36 = arith.constant 0 : index
    %c0_37 = arith.constant 0 : index
    %c0_38 = arith.constant 0 : index
    %50 = vector.load %arg2[%c0_35, %c0_36, %c0_37, %c0_38] : memref<1x4x16x16xf32, #tpu.memory_space<vmem>>, vector<1x1x16x16xf32>
    %51 = vector.shape_cast %50 : vector<1x1x16x16xf32> to vector<16x16xf32>
    %c1_39 = arith.constant 1 : index
    %c64 = arith.constant 64 : index
    %52 = vector.load %arg10[%c1_39, %c64] : memref<18x128xf32, #tpu.memory_space<vmem>>, vector<16x16xf32>
    tpu.vector_store %arg10[%c1_39, %c64], %51 {strides = array<i32>} : memref<18x128xf32, #tpu.memory_space<vmem>>, vector<16x16xf32>,
    %c0_40 = arith.constant 0 : index
    %c1_41 = arith.constant 1 : index
    %c0_42 = arith.constant 0 : index
    %c0_43 = arith.constant 0 : index
    %53 = vector.load %arg2[%c0_40, %c1_41, %c0_42, %c0_43] : memref<1x4x16x16xf32, #tpu.memory_space<vmem>>, vector<1x1x16x16xf32>
    %54 = vector.shape_cast %53 : vector<1x1x16x16xf32> to vector<16x16xf32>
    %c1_44 = arith.constant 1 : index
    %c80 = arith.constant 80 : index
    %55 = vector.load %arg10[%c1_44, %c80] : memref<18x128xf32, #tpu.memory_space<vmem>>, vector<16x16xf32>
    tpu.vector_store %arg10[%c1_44, %c80], %54 {strides = array<i32>} : memref<18x128xf32, #tpu.memory_space<vmem>>, vector<16x16xf32>,
    %c0_45 = arith.constant 0 : index
    %c2_46 = arith.constant 2 : index
    %c0_47 = arith.constant 0 : index
    %c0_48 = arith.constant 0 : index
    %56 = vector.load %arg2[%c0_45, %c2_46, %c0_47, %c0_48] : memref<1x4x16x16xf32, #tpu.memory_space<vmem>>, vector<1x1x16x16xf32>
    %57 = vector.shape_cast %56 : vector<1x1x16x16xf32> to vector<16x16xf32>
    %c1_49 = arith.constant 1 : index
    %c96 = arith.constant 96 : index
    %58 = vector.load %arg10[%c1_49, %c96] : memref<18x128xf32, #tpu.memory_space<vmem>>, vector<16x16xf32>
    tpu.vector_store %arg10[%c1_49, %c96], %57 {strides = array<i32>} : memref<18x128xf32, #tpu.memory_space<vmem>>, vector<16x16xf32>,
    %c0_50 = arith.constant 0 : index
    %c3_51 = arith.constant 3 : index
    %c0_52 = arith.constant 0 : index
    %c0_53 = arith.constant 0 : index
    %59 = vector.load %arg2[%c0_50, %c3_51, %c0_52, %c0_53] : memref<1x4x16x16xf32, #tpu.memory_space<vmem>>, vector<1x1x16x16xf32>
    %60 = vector.shape_cast %59 : vector<1x1x16x16xf32> to vector<16x16xf32>
    %c1_54 = arith.constant 1 : index
    %c112 = arith.constant 112 : index
    %61 = vector.load %arg10[%c1_54, %c112] : memref<18x128xf32, #tpu.memory_space<vmem>>, vector<16x16xf32>
    tpu.vector_store %arg10[%c1_54, %c112], %60 {strides = array<i32>} : memref<18x128xf32, #tpu.memory_space<vmem>>, vector<16x16xf32>,
    %cst_55 = arith.constant 0.000000e+00 : f32
    %62 = vector.broadcast %cst_55 : f32 to vector<16x128xf32>
    %c0_56 = arith.constant 0 : index
    %c0_57 = arith.constant 0 : index
    %63 = vector.load %arg10[%c0_56, %c0_57] : memref<18x128xf32, #tpu.memory_space<vmem>>, vector<16x128xf32>
    %c0_58 = arith.constant 0 : index
    %c0_59 = arith.constant 0 : index
    %c0_60 = arith.constant 0 : index
    %64 = vector.load %arg5[%c0_58, %c0_59, %c0_60] : memref<3x128x128xf32, #tpu.memory_space<vmem>>, vector<1x128x128xf32>
    %65 = vector.shape_cast %64 : vector<1x128x128xf32> to vector<128x128xf32>
    %cst_61 = arith.constant dense<0.000000e+00> : vector<16x128xf32>
    %66 = tpu.matmul %63, %65, %cst_61 {dimension_numbers = #tpu.dot_dimension_numbers<[1], [0], [0], [1], [0, 0, 1, 1], [], []>} : vector<16x128xf32>, vector<128x128xf32>, vector<16x128xf32> -> vector<16x128xf32>
    %67 = arith.addf %62, %66 : vector<16x128xf32>
    %c1_62 = arith.constant 1 : index
    %c0_63 = arith.constant 0 : index
    %68 = vector.load %arg10[%c1_62, %c0_63] : memref<18x128xf32, #tpu.memory_space<vmem>>, vector<16x128xf32>
    %c1_64 = arith.constant 1 : index
    %c0_65 = arith.constant 0 : index
    %c0_66 = arith.constant 0 : index
    %69 = vector.load %arg5[%c1_64, %c0_65, %c0_66] : memref<3x128x128xf32, #tpu.memory_space<vmem>>, vector<1x128x128xf32>
    %70 = vector.shape_cast %69 : vector<1x128x128xf32> to vector<128x128xf32>
    %cst_67 = arith.constant dense<0.000000e+00> : vector<16x128xf32>
    %71 = tpu.matmul %68, %70, %cst_67 {dimension_numbers = #tpu.dot_dimension_numbers<[1], [0], [0], [1], [0, 0, 1, 1], [], []>} : vector<16x128xf32>, vector<128x128xf32>, vector<16x128xf32> -> vector<16x128xf32>
    %72 = arith.addf %67, %71 : vector<16x128xf32>
    %c2_68 = arith.constant 2 : index
    %c0_69 = arith.constant 0 : index
    %73 = vector.load %arg10[%c2_68, %c0_69] : memref<18x128xf32, #tpu.memory_space<vmem>>, vector<16x128xf32>
    %c2_70 = arith.constant 2 : index
    %c0_71 = arith.constant 0 : index
    %c0_72 = arith.constant 0 : index
    %74 = vector.load %arg5[%c2_70, %c0_71, %c0_72] : memref<3x128x128xf32, #tpu.memory_space<vmem>>, vector<1x128x128xf32>
    %75 = vector.shape_cast %74 : vector<1x128x128xf32> to vector<128x128xf32>
    %cst_73 = arith.constant dense<0.000000e+00> : vector<16x128xf32>
    %76 = tpu.matmul %73, %75, %cst_73 {dimension_numbers = #tpu.dot_dimension_numbers<[1], [0], [0], [1], [0, 0, 1, 1], [], []>} : vector<16x128xf32>, vector<128x128xf32>, vector<16x128xf32> -> vector<16x128xf32>
    %77 = arith.addf %72, %76 : vector<16x128xf32>
    %c0_74 = arith.constant 0 : index
    %c0_75 = arith.constant 0 : index
    %78 = vector.load %arg6[%c0_74, %c0_75] : memref<1x128xf32, #tpu.memory_space<vmem>>, vector<1x128xf32>
    %79 = vector.broadcast %78 : vector<1x128xf32> to vector<16x128xf32>
    %80 = arith.addf %77, %79 : vector<16x128xf32>
    %cst_76 = arith.constant 0.000000e+00 : f32
    %81 = vector.broadcast %cst_76 : f32 to vector<16x128xf32>
    %82 = arith.maximumf %80, %81 : vector<16x128xf32>
    %c1_77 = arith.constant 1 : index
    %c0_78 = arith.constant 0 : index
    %83 = vector.load %arg11[%c1_77, %c0_78] : memref<18x128xf32, #tpu.memory_space<vmem>>, vector<16x128xf32>
    tpu.vector_store %arg11[%c1_77, %c0_78], %82 {strides = array<i32>} : memref<18x128xf32, #tpu.memory_space<vmem>>, vector<16x128xf32>,
    %cst_79 = arith.constant 0.000000e+00 : f32
    %84 = vector.broadcast %cst_79 : f32 to vector<16x128xf32>
    %c0_80 = arith.constant 0 : index
    %c0_81 = arith.constant 0 : index
    %85 = vector.load %arg11[%c0_80, %c0_81] : memref<18x128xf32, #tpu.memory_space<vmem>>, vector<16x128xf32>
    %c0_82 = arith.constant 0 : index
    %c0_83 = arith.constant 0 : index
    %c0_84 = arith.constant 0 : index
    %86 = vector.load %arg7[%c0_82, %c0_83, %c0_84] : memref<3x128x128xf32, #tpu.memory_space<vmem>>, vector<1x128x128xf32>
    %87 = vector.shape_cast %86 : vector<1x128x128xf32> to vector<128x128xf32>
    %cst_85 = arith.constant dense<0.000000e+00> : vector<16x128xf32>
    %88 = tpu.matmul %85, %87, %cst_85 {dimension_numbers = #tpu.dot_dimension_numbers<[1], [0], [0], [1], [0, 0, 1, 1], [], []>} : vector<16x128xf32>, vector<128x128xf32>, vector<16x128xf32> -> vector<16x128xf32>
    %89 = arith.addf %84, %88 : vector<16x128xf32>
    %c1_86 = arith.constant 1 : index
    %c0_87 = arith.constant 0 : index
    %90 = vector.load %arg11[%c1_86, %c0_87] : memref<18x128xf32, #tpu.memory_space<vmem>>, vector<16x128xf32>
    %c1_88 = arith.constant 1 : index
    %c0_89 = arith.constant 0 : index
    %c0_90 = arith.constant 0 : index
    %91 = vector.load %arg7[%c1_88, %c0_89, %c0_90] : memref<3x128x128xf32, #tpu.memory_space<vmem>>, vector<1x128x128xf32>
    %92 = vector.shape_cast %91 : vector<1x128x128xf32> to vector<128x128xf32>
    %cst_91 = arith.constant dense<0.000000e+00> : vector<16x128xf32>
    %93 = tpu.matmul %90, %92, %cst_91 {dimension_numbers = #tpu.dot_dimension_numbers<[1], [0], [0], [1], [0, 0, 1, 1], [], []>} : vector<16x128xf32>, vector<128x128xf32>, vector<16x128xf32> -> vector<16x128xf32>
    %94 = arith.addf %89, %93 : vector<16x128xf32>
    %c2_92 = arith.constant 2 : index
    %c0_93 = arith.constant 0 : index
    %95 = vector.load %arg11[%c2_92, %c0_93] : memref<18x128xf32, #tpu.memory_space<vmem>>, vector<16x128xf32>
    %c2_94 = arith.constant 2 : index
    %c0_95 = arith.constant 0 : index
    %c0_96 = arith.constant 0 : index
    %96 = vector.load %arg7[%c2_94, %c0_95, %c0_96] : memref<3x128x128xf32, #tpu.memory_space<vmem>>, vector<1x128x128xf32>
    %97 = vector.shape_cast %96 : vector<1x128x128xf32> to vector<128x128xf32>
    %cst_97 = arith.constant dense<0.000000e+00> : vector<16x128xf32>
    %98 = tpu.matmul %95, %97, %cst_97 {dimension_numbers = #tpu.dot_dimension_numbers<[1], [0], [0], [1], [0, 0, 1, 1], [], []>} : vector<16x128xf32>, vector<128x128xf32>, vector<16x128xf32> -> vector<16x128xf32>
    %99 = arith.addf %94, %98 : vector<16x128xf32>
    %c0_98 = arith.constant 0 : index
    %c0_99 = arith.constant 0 : index
    %100 = vector.load %arg8[%c0_98, %c0_99] : memref<1x128xf32, #tpu.memory_space<vmem>>, vector<1x128xf32>
    %101 = vector.broadcast %100 : vector<1x128xf32> to vector<16x128xf32>
    %102 = arith.addf %99, %101 : vector<16x128xf32>
    %cst_100 = arith.constant 0.000000e+00 : f32
    %103 = vector.broadcast %cst_100 : f32 to vector<16x128xf32>
    %104 = arith.maximumf %102, %103 : vector<16x128xf32>
    %c0_101 = arith.constant 0 : index
    %c0_102 = arith.constant 0 : index
    %c0_103 = arith.constant 0 : index
    %105 = vector.load %arg9[%c0_101, %c0_102, %c0_103] : memref<1x16x128xf32, #tpu.memory_space<vmem>>, vector<1x16x128xf32>
    %106 = vector.shape_cast %105 : vector<1x16x128xf32> to vector<16x128xf32>
    %107 = vector.shape_cast %104 : vector<16x128xf32> to vector<1x16x128xf32>
    tpu.vector_store %arg9[%c0_101, %c0_102, %c0_103], %107 {strides = array<i32>} : memref<1x16x128xf32, #tpu.memory_space<vmem>>, vector<1x16x128xf32>,
    return
  }
  func.func @transform_0(%arg0: i32) -> (i32, i32, i32) {
    %c0_i32 = arith.constant 0 : i32
    %c0_i32_0 = arith.constant 0 : i32
    %c0_i32_1 = arith.constant 0 : i32
    return %arg0, %c0_i32, %c0_i32_0 : i32, i32, i32
  }
  func.func @transform_1(%arg0: i32) -> (i32, i32, i32, i32) {
    %c0_i32 = arith.constant 0 : i32
    %c0_i32_0 = arith.constant 0 : i32
    %c0_i32_1 = arith.constant 0 : i32
    %c0_i32_2 = arith.constant 0 : i32
    return %arg0, %c0_i32, %c0_i32_0, %c0_i32_1 : i32, i32, i32, i32
  }
  func.func @transform_2(%arg0: i32) -> (i32, i32, i32) {
    %c0_i32 = arith.constant 0 : i32
    %c0_i32_0 = arith.constant 0 : i32
    %c0_i32_1 = arith.constant 0 : i32
    %c0_i32_2 = arith.constant 0 : i32
    return %c0_i32, %c0_i32_0, %c0_i32_1 : i32, i32, i32
  }
  func.func @transform_3(%arg0: i32) -> (i32, i32) {
    %c0_i32 = arith.constant 0 : i32
    %c0_i32_0 = arith.constant 0 : i32
    %c0_i32_1 = arith.constant 0 : i32
    return %c0_i32, %c0_i32_0 : i32, i32
  }
  func.func @transform_4(%arg0: i32) -> (i32, i32, i32) {
    %c0_i32 = arith.constant 0 : i32
    %c0_i32_0 = arith.constant 0 : i32
    %c0_i32_1 = arith.constant 0 : i32
    %c0_i32_2 = arith.constant 0 : i32
    return %c0_i32, %c0_i32_0, %c0_i32_1 : i32, i32, i32
  }
  func.func @transform_5(%arg0: i32) -> (i32, i32) {
    %c0_i32 = arith.constant 0 : i32
    %c0_i32_0 = arith.constant 0 : i32
    %c0_i32_1 = arith.constant 0 : i32
    return %c0_i32, %c0_i32_0 : i32, i32
  }
  func.func @transform_6(%arg0: i32) -> (i32, i32, i32) {
    %c0_i32 = arith.constant 0 : i32
    %c0_i32_0 = arith.constant 0 : i32
    %c0_i32_1 = arith.constant 0 : i32
    %c0_i32_2 = arith.constant 0 : i32
    return %c0_i32, %c0_i32_0, %c0_i32_1 : i32, i32, i32
  }
  func.func @transform_7(%arg0: i32) -> (i32, i32) {
    %c0_i32 = arith.constant 0 : i32
    %c0_i32_0 = arith.constant 0 : i32
    %c0_i32_1 = arith.constant 0 : i32
    return %c0_i32, %c0_i32_0 : i32, i32
  }
  func.func @transform_8(%arg0: i32) -> (i32, i32, i32) {
    %c0_i32 = arith.constant 0 : i32
    %c0_i32_0 = arith.constant 0 : i32
    %c0_i32_1 = arith.constant 0 : i32
    return %arg0, %c0_i32, %c0_i32_0 : i32, i32, i32
  }
}

</mosaic_0001>

<llo_original>
// kernel: upconv_forward.1
$region0: #{upconv_forward.1}
  #allocation0 [shape = 'u32[]', space=smem, size = 0x4, offset = 0x4, fixed_abs, tag = 'smem constant byte address 0x4 - core index']
  #allocation1 [shape = 'u32[144,128]{1,0:T(1,128)}', space=vmem, size = 0x12000, scoped, tag = 'internal scratch']
  #allocation2 [shape = 'f32[18,128]{1,0:T(8,128)}', space=vmem, size = 0x3000, scoped, tag = 'scratch operand']
  #allocation3 [shape = 'f32[18,128]{1,0:T(8,128)}', space=vmem, size = 0x3000, scoped, tag = 'scratch operand']
  %s0 = inlined_call_operand.vmem [shape: f32[2,8,32], index: 0, kind: input, shape index: {}]
  %s1 = inlined_call_operand.vmem [shape: f32[2,4,16,16], index: 1, kind: input, shape index: {}]
  %s2 = inlined_call_operand.vmem [shape: f32[2,32,64], index: 2, kind: input, shape index: {}]
  %s3 = inlined_call_operand.vmem [shape: f32[1,64], index: 3, kind: input, shape index: {}]
  %s4 = inlined_call_operand.hbm [shape: f32[3,128,128], index: 4, kind: input, shape index: {}]
  %s5 = inlined_call_operand.vmem [shape: f32[1,128], index: 5, kind: input, shape index: {}]
  %s6 = inlined_call_operand.hbm [shape: f32[3,128,128], index: 6, kind: input, shape index: {}]
  %s7 = inlined_call_operand.vmem [shape: f32[1,128], index: 7, kind: input, shape index: {}]
  %s8 = inlined_call_operand.vmem [shape: f32[2,16,128], index: 8, kind: output, shape index: {}]
  %s9 = sld [smem:[#allocation0]]
  $region73: #{upconv_forward.1} parent=0
    _
  %s11 = ssub.s32 1, %s9
  %s12 = scalar_select 0, %s11, %s9
  $region1: #{upconv_forward.1} parent=0
    #allocation4 [shape = 'u8[196608]{0}', space=vmem, size = 0x30000, scoped, tag = 'input window, operand 4, single buffered']
    #allocation5 [shape = 's32[2]{0}', space=sflag, size = 0x8, scoped, tag = 'scoped memory for upconv_forward.1']
    #allocation6 [shape = 'u8[196608]{0}', space=vmem, size = 0x30000, scoped, tag = 'input window, operand 6, single buffered']
    #allocation7 [shape = 's32[1]{0}', space=sflag, size = 0x4, scoped, tag = 'scoped memory for upconv_forward.1']
    %13 = vsyncpa [#allocation5], 0
    %14 = vsyncpa [#allocation7], 0
    loop: start=0, step=1, limit=4
    $region2: #{upconv_forward.1} parent=1 // loop_pre_header
      _
    $region3: #{upconv_forward.1} parent=1 // loop_header
      %s16 = sphi 0, %s20
      %p17 = scmp.ge.s32.totalorder %s16, 4
      %s26 = sphi 0, %s28
      %s29 = sphi 0, %s26
      %s30 = sphi 0, %s29
      %s46 = sphi 0, %s30
      %s52 = sphi 0, %s54
      %s55 = sphi 0, %s52
      %s56 = sphi 0, %s55
      %s72 = sphi 0, %s56
      %s76 = sphi 0, %s76
      %s78 = sphi 0, %s76
      %s79 = sphi 0, %s78
      %s93 = sphi 0, %s79
      %s97 = sphi 0, %s97
      %s99 = sphi 0, %s97
      %s100 = sphi 0, %s99
      %s114 = sphi 0, %s100
      %s118 = sphi 0, %s118
      %s120 = sphi 0, %s118
      %s121 = sphi 0, %s120
      %s135 = sphi 0, %s121
      %s139 = sphi 0, %s139
      %s141 = sphi 0, %s139
      %s142 = sphi 0, %s141
      %s156 = sphi 0, %s142
      %s160 = sphi 0, %s160
      %s162 = sphi 0, %s160
      %s163 = sphi 0, %s162
      %s177 = sphi 0, %s163
      %s181 = sphi 0, %s181
      %s183 = sphi 0, %s181
      %s184 = sphi 0, %s183
      %s198 = sphi 0, %s184
      %s204 = sphi 0, %s206
      %s207 = sphi 0, %s204
      %s208 = sphi 0, %s207
      %s224 = sphi 0, %s208
    $region4: #{upconv_forward.1} parent=1 // loop_header_branch
      %19 = sbr.rel (%p17) target = $region8
    $region5: #{upconv_forward.1} parent=1 // loop_body
      %s21 = ssub.s32 %s16, 1
      %s22 = ssub.s32 %s16, 2
      %s23 = sadd.s32 %s16, 1
      %s24 = ssub.s32 %s16, %s23
      %p25 = scmp.eq.s32.totalorder %s24, 0
      %s27 = sadd.s32 %s26, 1
      %s28 = scalar_select %p25, %s26, %s27
      %p31 = pneg %p25
      %p32 = scmp.eq.s32.totalorder %s16, 1
      %p33 = por %p31, %p32
      %p34 = scmp.ne.s32.totalorder %s26, %s29
      %p35 = scmp.eq.s32.totalorder %s16, 0
      %p36 = por %p34, %p35
      %p37 = scmp.ne.s32.totalorder %s26, %s29
      %p38 = scmp.eq.s32.totalorder %s21, 1
      %p39 = por %p37, %p38
      %p40 = scmp.ne.s32.totalorder %s29, %s30
      %p41 = scmp.eq.s32.totalorder %s21, 0
      %p42 = por %p40, %p41
      %p43 = scmp.ne.s32.totalorder %s29, %s30
      %p44 = scmp.eq.s32.totalorder %s22, 1
      %p45 = por %p43, %p44
      %p47 = scmp.ne.s32.totalorder %s30, %s46
      %p48 = scmp.eq.s32.totalorder %s22, 0
      %p49 = por %p47, %p48
      %s50 = ssub.s32 %s16, %s23
      %p51 = scmp.eq.s32.totalorder %s50, 0
      %s53 = sadd.s32 %s52, 1
      %s54 = scalar_select %p51, %s52, %s53
      %p57 = pneg %p51
      %p58 = scmp.eq.s32.totalorder %s16, 1
      %p59 = por %p57, %p58
      %p60 = scmp.ne.s32.totalorder %s52, %s55
      %p61 = scmp.eq.s32.totalorder %s16, 0
      %p62 = por %p60, %p61
      %p63 = scmp.ne.s32.totalorder %s52, %s55
      %p64 = scmp.eq.s32.totalorder %s21, 1
      %p65 = por %p63, %p64
      %p66 = scmp.ne.s32.totalorder %s55, %s56
      %p67 = scmp.eq.s32.totalorder %s21, 0
      %p68 = por %p66, %p67
      %p69 = scmp.ne.s32.totalorder %s55, %s56
      %p70 = scmp.eq.s32.totalorder %s22, 1
      %p71 = por %p69, %p70
      %p73 = scmp.ne.s32.totalorder %s56, %s72
      %p74 = scmp.eq.s32.totalorder %s22, 0
      %p75 = por %p73, %p74
      %s77 = sadd.s32 %s76, 1
      %p80 = scmp.eq.s32.totalorder %s16, 1
      %p81 = scmp.ne.s32.totalorder %s76, %s78
      %p82 = scmp.eq.s32.totalorder %s16, 0
      %p83 = por %p81, %p82
      %p84 = scmp.ne.s32.totalorder %s76, %s78
      %p85 = scmp.eq.s32.totalorder %s21, 1
      %p86 = por %p84, %p85
      %p87 = scmp.ne.s32.totalorder %s78, %s79
      %p88 = scmp.eq.s32.totalorder %s21, 0
      %p89 = por %p87, %p88
      %p90 = scmp.ne.s32.totalorder %s78, %s79
      %p91 = scmp.eq.s32.totalorder %s22, 1
      %p92 = por %p90, %p91
      %p94 = scmp.ne.s32.totalorder %s79, %s93
      %p95 = scmp.eq.s32.totalorder %s22, 0
      %p96 = por %p94, %p95
      %s98 = sadd.s32 %s97, 1
      %p101 = scmp.eq.s32.totalorder %s16, 1
      %p102 = scmp.ne.s32.totalorder %s97, %s99
      %p103 = scmp.eq.s32.totalorder %s16, 0
      %p104 = por %p102, %p103
      %p105 = scmp.ne.s32.totalorder %s97, %s99
      %p106 = scmp.eq.s32.totalorder %s21, 1
      %p107 = por %p105, %p106
      %p108 = scmp.ne.s32.totalorder %s99, %s100
      %p109 = scmp.eq.s32.totalorder %s21, 0
      %p110 = por %p108, %p109
      %p111 = scmp.ne.s32.totalorder %s99, %s100
      %p112 = scmp.eq.s32.totalorder %s22, 1
      %p113 = por %p111, %p112
      %p115 = scmp.ne.s32.totalorder %s100, %s114
      %p116 = scmp.eq.s32.totalorder %s22, 0
      %p117 = por %p115, %p116
      %s119 = sadd.s32 %s118, 1
      %p122 = scmp.eq.s32.totalorder %s16, 1
      %p123 = scmp.ne.s32.totalorder %s118, %s120
      %p124 = scmp.eq.s32.totalorder %s16, 0
      %p125 = por %p123, %p124
      %p126 = scmp.ne.s32.totalorder %s118, %s120
      %p127 = scmp.eq.s32.totalorder %s21, 1
      %p128 = por %p126, %p127
      %p129 = scmp.ne.s32.totalorder %s120, %s121
      %p130 = scmp.eq.s32.totalorder %s21, 0
      %p131 = por %p129, %p130
      %p132 = scmp.ne.s32.totalorder %s120, %s121
      %p133 = scmp.eq.s32.totalorder %s22, 1
      %p134 = por %p132, %p133
      %p136 = scmp.ne.s32.totalorder %s121, %s135
      %p137 = scmp.eq.s32.totalorder %s22, 0
      %p138 = por %p136, %p137
      %s140 = sadd.s32 %s139, 1
      %p143 = scmp.eq.s32.totalorder %s16, 1
      %p144 = scmp.ne.s32.totalorder %s139, %s141
      %p145 = scmp.eq.s32.totalorder %s16, 0
      %p146 = por %p144, %p145
      %p147 = scmp.ne.s32.totalorder %s139, %s141
      %p148 = scmp.eq.s32.totalorder %s21, 1
      %p149 = por %p147, %p148
      %p150 = scmp.ne.s32.totalorder %s141, %s142
      %p151 = scmp.eq.s32.totalorder %s21, 0
      %p152 = por %p150, %p151
      %p153 = scmp.ne.s32.totalorder %s141, %s142
      %p154 = scmp.eq.s32.totalorder %s22, 1
      %p155 = por %p153, %p154
      %p157 = scmp.ne.s32.totalorder %s142, %s156
      %p158 = scmp.eq.s32.totalorder %s22, 0
      %p159 = por %p157, %p158
      %s161 = sadd.s32 %s160, 1
      %p164 = scmp.eq.s32.totalorder %s16, 1
      %p165 = scmp.ne.s32.totalorder %s160, %s162
      %p166 = scmp.eq.s32.totalorder %s16, 0
      %p167 = por %p165, %p166
      %p168 = scmp.ne.s32.totalorder %s160, %s162
      %p169 = scmp.eq.s32.totalorder %s21, 1
      %p170 = por %p168, %p169
      %p171 = scmp.ne.s32.totalorder %s162, %s163
      %p172 = scmp.eq.s32.totalorder %s21, 0
      %p173 = por %p171, %p172
      %p174 = scmp.ne.s32.totalorder %s162, %s163
      %p175 = scmp.eq.s32.totalorder %s22, 1
      %p176 = por %p174, %p175
      %p178 = scmp.ne.s32.totalorder %s163, %s177
      %p179 = scmp.eq.s32.totalorder %s22, 0
      %p180 = por %p178, %p179
      %s182 = sadd.s32 %s181, 1
      %p185 = scmp.eq.s32.totalorder %s16, 1
      %p186 = scmp.ne.s32.totalorder %s181, %s183
      %p187 = scmp.eq.s32.totalorder %s16, 0
      %p188 = por %p186, %p187
      %p189 = scmp.ne.s32.totalorder %s181, %s183
      %p190 = scmp.eq.s32.totalorder %s21, 1
      %p191 = por %p189, %p190
      %p192 = scmp.ne.s32.totalorder %s183, %s184
      %p193 = scmp.eq.s32.totalorder %s21, 0
      %p194 = por %p192, %p193
      %p195 = scmp.ne.s32.totalorder %s183, %s184
      %p196 = scmp.eq.s32.totalorder %s22, 1
      %p197 = por %p195, %p196
      %p199 = scmp.ne.s32.totalorder %s184, %s198
      %p200 = scmp.eq.s32.totalorder %s22, 0
      %p201 = por %p199, %p200
      %s202 = ssub.s32 %s16, %s23
      %p203 = scmp.eq.s32.totalorder %s202, 0
      %s205 = sadd.s32 %s204, 1
      %s206 = scalar_select %p203, %s204, %s205
      %p209 = pneg %p203
      %p210 = scmp.eq.s32.totalorder %s16, 1
      %p211 = por %p209, %p210
      %p212 = scmp.ne.s32.totalorder %s204, %s207
      %p213 = scmp.eq.s32.totalorder %s16, 0
      %p214 = por %p212, %p213
      %p215 = scmp.ne.s32.totalorder %s204, %s207
      %p216 = scmp.eq.s32.totalorder %s21, 1
      %p217 = por %p215, %p216
      %p218 = scmp.ne.s32.totalorder %s207, %s208
      %p219 = scmp.eq.s32.totalorder %s21, 0
      %p220 = por %p218, %p219
      %p221 = scmp.ne.s32.totalorder %s207, %s208
      %p222 = scmp.eq.s32.totalorder %s22, 1
      %p223 = por %p221, %p222
      %p225 = scmp.ne.s32.totalorder %s208, %s224
      %p226 = scmp.eq.s32.totalorder %s22, 0
      %p227 = por %p225, %p226
      %p228 = scmp.le.s32.totalorder 1, %s16
      %p229 = scmp.lt.s32.totalorder %s16, 3
      %p230 = pnand %p228, %p229
      %p231 = pneg %p230
      // Predicated region
      $region9: #{upconv_forward.1} parent=5 // pred_check
        _
      $region10: #{upconv_forward.1} parent=5 // pred_check_branch
        %233 = sbr.rel (%p230) target = $region12
      $region11: #{upconv_forward.1} parent=5 // pred_region
        %s234 = ssub.s32 %s16, 1
        // Predicated region
        $region13: #{upconv_forward.1} parent=11 // pred_check
          %p235 = pneg %p89
        $region14: #{upconv_forward.1} parent=11 // pred_check_branch
          %237 = sbr.rel (%p235) target = $region16
        $region15: #{upconv_forward.1} parent=11 // pred_region
          _
        $region16: #{upconv_forward.1} parent=11 // pred_fallthru
          _
        // Predicated region
        $region17: #{upconv_forward.1} parent=11 // pred_check
          %p238 = pneg %p110
        $region18: #{upconv_forward.1} parent=11 // pred_check_branch
          %240 = sbr.rel (%p238) target = $region20
        $region19: #{upconv_forward.1} parent=11 // pred_region
          _
        $region20: #{upconv_forward.1} parent=11 // pred_fallthru
          _
        // Predicated region
        $region21: #{upconv_forward.1} parent=11 // pred_check
          %p241 = pneg %p131
        $region22: #{upconv_forward.1} parent=11 // pred_check_branch
          %243 = sbr.rel (%p241) target = $region24
        $region23: #{upconv_forward.1} parent=11 // pred_region
          %s245 = ssub.s32 6144, 6144
          %246 = vsyncadd [#allocation5], %s245
          %s247 = sshll.u32 [#allocation4], 4
          %s248 = int_to_ptr.vmem [resolvable:$true] %s247
          %253 = dma.hbm_to_vmem [thread:$0]  %s4, 6144, %s248, [#allocation5], 128, 128, 8
        $region24: #{upconv_forward.1} parent=11 // pred_fallthru
          _
        // Predicated region
        $region25: #{upconv_forward.1} parent=11 // pred_check
          %p254 = pneg %p152
        $region26: #{upconv_forward.1} parent=11 // pred_check_branch
          %256 = sbr.rel (%p254) target = $region28
        $region27: #{upconv_forward.1} parent=11 // pred_region
          _
        $region28: #{upconv_forward.1} parent=11 // pred_fallthru
          _
        // Predicated region
        $region29: #{upconv_forward.1} parent=11 // pred_check
          %p257 = pneg %p173
        $region30: #{upconv_forward.1} parent=11 // pred_check_branch
          %259 = sbr.rel (%p257) target = $region32
        $region31: #{upconv_forward.1} parent=11 // pred_region
          %s261 = ssub.s32 6144, 6144
          %262 = vsyncadd [#allocation7], %s261
          %s263 = sshll.u32 [#allocation6], 4
          %s264 = int_to_ptr.vmem [resolvable:$true] %s263
          %269 = dma.hbm_to_vmem [thread:$0]  %s6, 6144, %s264, [#allocation7], 128, 128, 8
        $region32: #{upconv_forward.1} parent=11 // pred_fallthru
          _
        // Predicated region
        $region33: #{upconv_forward.1} parent=11 // pred_check
          %p270 = pneg %p194
        $region34: #{upconv_forward.1} parent=11 // pred_check_branch
          %272 = sbr.rel (%p270) target = $region36
        $region35: #{upconv_forward.1} parent=11 // pred_region
          _
        $region36: #{upconv_forward.1} parent=11 // pred_fallthru
          _
      $region12: #{upconv_forward.1} parent=5 // pred_fallthru
        _
      %p273 = scmp.lt.s32.totalorder %s16, 2
      // Predicated region
      $region37: #{upconv_forward.1} parent=5 // pred_check
        %p274 = pneg %p273
      $region38: #{upconv_forward.1} parent=5 // pred_check_branch
        %276 = sbr.rel (%p274) target = $region40
      $region39: #{upconv_forward.1} parent=5 // pred_region
        // Predicated region
        $region41: #{upconv_forward.1} parent=39 // pred_check
          %p277 = pneg %p36
        $region42: #{upconv_forward.1} parent=39 // pred_check_branch
          %279 = sbr.rel (%p277) target = $region44
        $region43: #{upconv_forward.1} parent=39 // pred_region
          %p280 = scmp.lt.s32.totalorder %s16, 1
          %s281 = scalar_select %p280, %s16, 1
          %s282 = smul.addr %s281, 8
          %s283 = scalar_lea.vmem %s0, %s282
        $region44: #{upconv_forward.1} parent=39 // pred_fallthru
          _
        // Predicated region
        $region45: #{upconv_forward.1} parent=39 // pred_check
          %p284 = pneg %p62
        $region46: #{upconv_forward.1} parent=39 // pred_check_branch
          %286 = sbr.rel (%p284) target = $region48
        $region47: #{upconv_forward.1} parent=39 // pred_region
          %p287 = scmp.lt.s32.totalorder %s16, 1
          %s288 = scalar_select %p287, %s16, 1
          %s289 = smul.addr %s288, 8
          %s290 = smul.addr %s289, 8
          %s291 = scalar_lea.vmem %s1, %s290
        $region48: #{upconv_forward.1} parent=39 // pred_fallthru
          _
      $region40: #{upconv_forward.1} parent=5 // pred_fallthru
        _
      %p292 = scmp.le.s32.totalorder 1, %s16
      %p293 = scmp.lt.s32.totalorder %s16, 3
      %p294 = pnand %p292, %p293
      %p295 = pneg %p294
      // Predicated region
      $region49: #{upconv_forward.1} parent=5 // pred_check
        _
      $region50: #{upconv_forward.1} parent=5 // pred_check_branch
        %297 = sbr.rel (%p294) target = $region52
      $region51: #{upconv_forward.1} parent=5 // pred_region
        %s298 = ssub.s32 %s16, 1
        // Predicated region
        $region53: #{upconv_forward.1} parent=51 // pred_check
          %p299 = pneg %p131
        $region54: #{upconv_forward.1} parent=51 // pred_check_branch
          %301 = sbr.rel (%p299) target = $region56
        $region55: #{upconv_forward.1} parent=51 // pred_region
          %302 = dma.done [#allocation5], 6144
        $region56: #{upconv_forward.1} parent=51 // pred_fallthru
          _
        // Predicated region
        $region57: #{upconv_forward.1} parent=51 // pred_check
          %p303 = pneg %p173
        $region58: #{upconv_forward.1} parent=51 // pred_check_branch
          %305 = sbr.rel (%p303) target = $region60
        $region59: #{upconv_forward.1} parent=51 // pred_region
          %306 = dma.done [#allocation7], 6144
        $region60: #{upconv_forward.1} parent=51 // pred_fallthru
          _
        %p307 = scmp.lt.s32.totalorder %s21, 1
        %s308 = scalar_select %p307, %s21, 1
        %s309 = smul.addr %s308, 8
        %s310 = scalar_lea.vmem %s0, %s309
        %p311 = pneg %p42
        %p312 = pneg %p39
        %p313 = scmp.lt.s32.totalorder %s21, 1
        %s314 = scalar_select %p313, %s21, 1
        %s315 = smul.addr %s314, 8
        %s316 = smul.addr %s315, 8
        %s317 = scalar_lea.vmem %s1, %s316
        %p318 = pneg %p68
        %p319 = pneg %p65
        %p320 = pneg %p89
        %p321 = pneg %p86
        %p322 = pneg %p110
        %p323 = pneg %p107
        %p324 = pneg %p131
        %p325 = pneg %p128
        %p326 = pneg %p152
        %p327 = pneg %p149
        %p328 = pneg %p173
        %p329 = pneg %p170
        %p330 = pneg %p194
        %p331 = pneg %p191
        %p332 = pneg %p220
        %p333 = pneg %p217
        %p334 = scmp.lt.s32.totalorder %s21, 1
        %s335 = scalar_select %p334, %s21, 1
        %s336 = smul.addr %s335, 2
        %s337 = smul.addr %s336, 8
        %s338 = scalar_lea.vmem %s8, %s337
        %p339 = scmp.lt.s32.totalorder %s21, 1
        %s340 = scalar_select %p339, %s21, 1
        %s341 = smul.addr %s340, 8
        %s342 = scalar_lea.vmem %s0, %s341
        %p343 = scmp.lt.s32.totalorder %s21, 1
        %s344 = scalar_select %p343, %s21, 1
        %s345 = smul.addr %s344, 8
        %s346 = smul.addr %s345, 8
        %s347 = scalar_lea.vmem %s1, %s346
        %p348 = scmp.lt.s32.totalorder %s21, 1
        %s349 = scalar_select %p348, %s21, 1
        %s350 = smul.addr %s349, 2
        %s351 = smul.addr %s350, 8
        %s352 = scalar_lea.vmem %s8, %s351
        %353 = vst [vmem:[#allocation2] sm:$0xff] 0.0
        %354 = vst [vmem:[#allocation2 + $0x8] sm:$0xff] 0.0
        %355 = vst [vmem:[#allocation2 + $0x10] sm:$0x3] 0.0
        %356 = vst [vmem:[#allocation3] sm:$0xff] 0.0
        %357 = vst [vmem:[#allocation3 + $0x8] sm:$0xff] 0.0
        %358 = vst [vmem:[#allocation3 + $0x10] sm:$0x3] 0.0
        %v359 = vld [vmem:[%s342] sm:$0xff]
        %v360 = vld [vmem:[%s2] sm:$0xff]
        %v361 = vld [vmem:[%s2 + $0x8] sm:$0xff]
        %v362 = vld [vmem:[%s2 + $0x10] sm:$0xff]
        %v363 = vld [vmem:[%s2 + $0x18] sm:$0xff]
        %v364 = vld [vmem:[%s3] sm:$0x1]
        %v366 = vlaneseq
        %v367 = vshrl.u32 %v366, 7
        %v368 = vsub.s32 0, %v367
        %v369 = vrot.slane %v364, %v368
        %vm371 = vcmask 261120
        %v373 = vsel %vm371, %v359, 0
        %375 = vmatprep.subr.mxu0 0.0
        %376 = vmatpush1.msra.mxu0 %v360
        %377 = vmatprep.subr.mxu0 0.0
        %378 = vmatpush1.msra.mxu0 %v361
        %379 = vmatprep.subr.mxu0 0.0
        %380 = vmatpush1.msra.mxu0 %v362
        %381 = vmatprep.subr.mxu0 0.0
        %382 = vmatpush1.msra.mxu0 %v363
        %383 = vmatprep.subr.mxu0 0.0
        %384 = vmatpush1.msra.mxu0 0.0
        %385 = vmatprep.subr.mxu0 0.0
        %386 = vmatpush1.msra.mxu0 0.0
        %387 = vmatprep.subr.mxu0 0.0
        %388 = vmatpush1.msra.mxu0 0.0
        %389 = vmatprep.subr.mxu0 0.0
        %390 = vmatpush1.msra.mxu0 0.0
        %391 = vmatprep.subr.mxu0 0.0
        %392 = vmatpush1.msra.mxu0 0.0
        %393 = vmatprep.subr.mxu0 0.0
        %394 = vmatpush1.msra.mxu0 0.0
        %395 = vmatprep.subr.mxu0 0.0
        %396 = vmatpush1.msra.mxu0 0.0
        %397 = vmatprep.subr.mxu0 0.0
        %398 = vmatpush1.msra.mxu0 0.0
        %399 = vmatprep.subr.mxu0 0.0
        %400 = vmatpush1.msra.mxu0 0.0
        %401 = vmatprep.subr.mxu0 0.0
        %402 = vmatpush1.msra.mxu0 0.0
        %403 = vmatprep.subr.mxu0 0.0
        %404 = vmatpush1.msra.mxu0 0.0
        %405 = vmatprep.subr.mxu0 0.0
        %406 = vmatpush1.msra.mxu0 0.0
        %407 = vmatprep.subr.mxu0 0.0
        %408 = vmatpush1.msra.mxu0 0.0
        %409 = vmatprep.subr.mxu0 0.0
        %410 = vmatpush1.msra.mxu0 0.0
        %411 = vmatprep.subr.mxu0 0.0
        %412 = vmatpush1.msra.mxu0 0.0
        %413 = vmatprep.subr.mxu0 0.0
        %414 = vmatpush1.msra.mxu0 0.0
        %415 = vmatprep.subr.mxu0 0.0
        %416 = vmatpush1.msra.mxu0 0.0
        %417 = vmatprep.subr.mxu0 0.0
        %418 = vmatpush1.msra.mxu0 0.0
        %419 = vmatprep.subr.mxu0 0.0
        %420 = vmatpush1.msra.mxu0 0.0
        %421 = vmatprep.subr.mxu0 0.0
        %422 = vmatpush1.msra.mxu0 0.0
        %423 = vmatprep.subr.mxu0 0.0
        %424 = vmatpush1.msra.mxu0 0.0
        %425 = vmatprep.subr.mxu0 0.0
        %426 = vmatpush1.msra.mxu0 0.0
        %427 = vmatprep.subr.mxu0 0.0
        %428 = vmatpush1.msra.mxu0 0.0
        %429 = vmatprep.subr.mxu0 0.0
        %430 = vmatpush1.msra.mxu0 0.0
        %431 = vmatprep.subr.mxu0 0.0
        %432 = vmatpush1.msra.mxu0 0.0
        %433 = vmatprep.subr.mxu0 0.0
        %434 = vmatpush1.msra.mxu0 0.0
        %435 = vmatprep.subr.mxu0 0.0
        %436 = vmatpush1.msra.mxu0 0.0
        %437 = vmatprep.subr.mxu0 0.0
        %438 = vmatpush1.msra.mxu0 0.0
        %439 = vmatprep.mubr.f32.mxu0 0.0
        %440 = vmatmul.mubr.f32.gmra.mrb[0].mxu0 %v373
        %v441 = vpop.f32.mrb[0].mxu0
        %v442 = vadd.f32 %v369, %v441
        %v443 = vpop.f32.mrb[0].mxu0
        %444 = vdwg.mxu0
        %vm445 = vcmask 516096
        %446 = vst.msk [vmem:[#allocation2 + $0x1] sm:$0x1] %vm445, %v442
        %vm447 = vcmask 517121
        %448 = vst.msk [vmem:[#allocation2 + $0x2] sm:$0x2] %vm447, %v442
        %vm449 = vcmask 518146
        %450 = vst.msk [vmem:[#allocation2 + $0x3] sm:$0x4] %vm449, %v442
        %vm451 = vcmask 519171
        %452 = vst.msk [vmem:[#allocation2 + $0x4] sm:$0x8] %vm451, %v442
        %vm453 = vcmask 520196
        %454 = vst.msk [vmem:[#allocation2 + $0x5] sm:$0x10] %vm453, %v442
        %vm455 = vcmask 521221
        %456 = vst.msk [vmem:[#allocation2 + $0x6] sm:$0x20] %vm455, %v442
        %vm457 = vcmask 522246
        %458 = vst.msk [vmem:[#allocation2 + $0x7] sm:$0x40] %vm457, %v442
        %vm459 = vcmask 523271
        %460 = vst.msk [vmem:[#allocation2 + $0x8] sm:$0x80] %vm459, %v442
        %s461 = scalar_lea.vmem %s2, 32
        %v462 = vld [vmem:[%s461] sm:$0xff]
        %v463 = vld [vmem:[%s461 + $0x8] sm:$0xff]
        %v464 = vld [vmem:[%s461 + $0x10] sm:$0xff]
        %v465 = vld [vmem:[%s461 + $0x18] sm:$0xff]
        %v466 = vld [vmem:[%s3] sm:$0x1]
        %v468 = vlaneseq
        %v469 = vshrl.u32 %v468, 7
        %v470 = vsub.s32 0, %v469
        %v471 = vrot.slane %v466, %v470
        %473 = vmatprep.subr.mxu0 0.0
        %474 = vmatpush1.msra.mxu0 %v462
        %475 = vmatprep.subr.mxu0 0.0
        %476 = vmatpush1.msra.mxu0 %v463
        %477 = vmatprep.subr.mxu0 0.0
        %478 = vmatpush1.msra.mxu0 %v464
        %479 = vmatprep.subr.mxu0 0.0
        %480 = vmatpush1.msra.mxu0 %v465
        %481 = vmatprep.subr.mxu0 0.0
        %482 = vmatpush1.msra.mxu0 0.0
        %483 = vmatprep.subr.mxu0 0.0
        %484 = vmatpush1.msra.mxu0 0.0
        %485 = vmatprep.subr.mxu0 0.0
        %486 = vmatpush1.msra.mxu0 0.0
        %487 = vmatprep.subr.mxu0 0.0
        %488 = vmatpush1.msra.mxu0 0.0
        %489 = vmatprep.subr.mxu0 0.0
        %490 = vmatpush1.msra.mxu0 0.0
        %491 = vmatprep.subr.mxu0 0.0
        %492 = vmatpush1.msra.mxu0 0.0
        %493 = vmatprep.subr.mxu0 0.0
        %494 = vmatpush1.msra.mxu0 0.0
        %495 = vmatprep.subr.mxu0 0.0
        %496 = vmatpush1.msra.mxu0 0.0
        %497 = vmatprep.subr.mxu0 0.0
        %498 = vmatpush1.msra.mxu0 0.0
        %499 = vmatprep.subr.mxu0 0.0
        %500 = vmatpush1.msra.mxu0 0.0
        %501 = vmatprep.subr.mxu0 0.0
        %502 = vmatpush1.msra.mxu0 0.0
        %503 = vmatprep.subr.mxu0 0.0
        %504 = vmatpush1.msra.mxu0 0.0
        %505 = vmatprep.subr.mxu0 0.0
        %506 = vmatpush1.msra.mxu0 0.0
        %507 = vmatprep.subr.mxu0 0.0
        %508 = vmatpush1.msra.mxu0 0.0
        %509 = vmatprep.subr.mxu0 0.0
        %510 = vmatpush1.msra.mxu0 0.0
        %511 = vmatprep.subr.mxu0 0.0
        %512 = vmatpush1.msra.mxu0 0.0
        %513 = vmatprep.subr.mxu0 0.0
        %514 = vmatpush1.msra.mxu0 0.0
        %515 = vmatprep.subr.mxu0 0.0
        %516 = vmatpush1.msra.mxu0 0.0
        %517 = vmatprep.subr.mxu0 0.0
        %518 = vmatpush1.msra.mxu0 0.0
        %519 = vmatprep.subr.mxu0 0.0
        %520 = vmatpush1.msra.mxu0 0.0
        %521 = vmatprep.subr.mxu0 0.0
        %522 = vmatpush1.msra.mxu0 0.0
        %523 = vmatprep.subr.mxu0 0.0
        %524 = vmatpush1.msra.mxu0 0.0
        %525 = vmatprep.subr.mxu0 0.0
        %526 = vmatpush1.msra.mxu0 0.0
        %527 = vmatprep.subr.mxu0 0.0
        %528 = vmatpush1.msra.mxu0 0.0
        %529 = vmatprep.subr.mxu0 0.0
        %530 = vmatpush1.msra.mxu0 0.0
        %531 = vmatprep.subr.mxu0 0.0
        %532 = vmatpush1.msra.mxu0 0.0
        %533 = vmatprep.subr.mxu0 0.0
        %534 = vmatpush1.msra.mxu0 0.0
        %535 = vmatprep.subr.mxu0 0.0
        %536 = vmatpush1.msra.mxu0 0.0
        %537 = vmatprep.mubr.f32.mxu0 0.0
        %538 = vmatmul.mubr.f32.gmra.mrb[0].mxu0 %v373
        %v539 = vpop.f32.mrb[0].mxu0
        %v540 = vadd.f32 %v471, %v539
        %v541 = vpop.f32.mrb[0].mxu0
        %542 = vdwg.mxu0
        %543 = vst.msk [vmem:[#allocation2 + $0x2] sm:$0x1] %vm445, %v540
        %544 = vst.msk [vmem:[#allocation2 + $0x3] sm:$0x2] %vm447, %v540
        %545 = vst.msk [vmem:[#allocation2 + $0x4] sm:$0x4] %vm449, %v540
        %546 = vst.msk [vmem:[#allocation2 + $0x5] sm:$0x8] %vm451, %v540
        %547 = vst.msk [vmem:[#allocation2 + $0x6] sm:$0x10] %vm453, %v540
        %548 = vst.msk [vmem:[#allocation2 + $0x7] sm:$0x20] %vm455, %v540
        %549 = vst.msk [vmem:[#allocation2 + $0x8] sm:$0x40] %vm457, %v540
        %550 = vst.msk [vmem:[#allocation2 + $0x9] sm:$0x80] %vm459, %v540
        %v551 = vld [vmem:[%s347] sm:$0xff]
        %v552 = vld [vmem:[%s347 + $0x8] sm:$0xff]
        %555 = vrot.lane.b32.xlu0 %v551, 64
        %v556 = vpop.permute.xlu0 %555
        %557 = vrot.lane.b32.xlu0 %v552, 64
        %v558 = vpop.permute.xlu0 %557
        %vm561 = vcmask 654848
        %562 = vst.msk [vmem:[#allocation2 + $0x1] sm:$0xff] %vm561, %v556
        %563 = vst.msk [vmem:[#allocation2 + $0x9] sm:$0xff] %vm561, %v558
        %s564 = scalar_lea.vmem %s347, 16
        %v565 = vld [vmem:[%s564] sm:$0xff]
        %v566 = vld [vmem:[%s564 + $0x8] sm:$0xff]
        %569 = vrot.lane.b32.xlu0 %v565, 80
        %v570 = vpop.permute.xlu0 %569
        %571 = vrot.lane.b32.xlu0 %v566, 80
        %v572 = vpop.permute.xlu0 %571
        %vm575 = vcmask 786048
        %576 = vst.msk [vmem:[#allocation2 + $0x1] sm:$0xff] %vm575, %v570
        %577 = vst.msk [vmem:[#allocation2 + $0x9] sm:$0xff] %vm575, %v572
        %s578 = scalar_lea.vmem %s347, 32
        %v579 = vld [vmem:[%s578] sm:$0xff]
        %v580 = vld [vmem:[%s578 + $0x8] sm:$0xff]
        %583 = vrot.lane.b32.xlu0 %v579, 96
        %v584 = vpop.permute.xlu0 %583
        %585 = vrot.lane.b32.xlu0 %v580, 96
        %v586 = vpop.permute.xlu0 %585
        %vm589 = vcmask 917248
        %590 = vst.msk [vmem:[#allocation2 + $0x1] sm:$0xff] %vm589, %v584
        %591 = vst.msk [vmem:[#allocation2 + $0x9] sm:$0xff] %vm589, %v586
        %s592 = scalar_lea.vmem %s347, 48
        %v593 = vld [vmem:[%s592] sm:$0xff]
        %v594 = vld [vmem:[%s592 + $0x8] sm:$0xff]
        %597 = vrot.lane.b32.xlu0 %v593, 112
        %v598 = vpop.permute.xlu0 %597
        %599 = vrot.lane.b32.xlu0 %v594, 112
        %v600 = vpop.permute.xlu0 %599
        %vm603 = vcmask 1048448
        %604 = vst.msk [vmem:[#allocation2 + $0x1] sm:$0xff] %vm603, %v598
        %605 = vst.msk [vmem:[#allocation2 + $0x9] sm:$0xff] %vm603, %v600
        %v606 = vld [vmem:[#allocation2] sm:$0xff]
        %v607 = vld [vmem:[#allocation2 + $0x8] sm:$0xff]
        %v608 = vld [vmem:[#allocation4] sm:$0xff]
        %v609 = vld [vmem:[#allocation4 + $0x8] sm:$0xff]
        %v610 = vld [vmem:[#allocation4 + $0x10] sm:$0xff]
        %v611 = vld [vmem:[#allocation4 + $0x18] sm:$0xff]
        %v612 = vld [vmem:[#allocation4 + $0x20] sm:$0xff]
        %v613 = vld [vmem:[#allocation4 + $0x28] sm:$0xff]
        %v614 = vld [vmem:[#allocation4 + $0x30] sm:$0xff]
        %v615 = vld [vmem:[#allocation4 + $0x38] sm:$0xff]
        %v616 = vld [vmem:[#allocation4 + $0x40] sm:$0xff]
        %v617 = vld [vmem:[#allocation4 + $0x48] sm:$0xff]
        %v618 = vld [vmem:[#allocation4 + $0x50] sm:$0xff]
        %v619 = vld [vmem:[#allocation4 + $0x58] sm:$0xff]
        %v620 = vld [vmem:[#allocation4 + $0x60] sm:$0xff]
        %v621 = vld [vmem:[#allocation4 + $0x68] sm:$0xff]
        %v622 = vld [vmem:[#allocation4 + $0x70] sm:$0xff]
        %v623 = vld [vmem:[#allocation4 + $0x78] sm:$0xff]
        %v624 = vld [vmem:[#allocation2 + $0x1] sm:$0xff]
        %v625 = vld [vmem:[#allocation2 + $0x9] sm:$0xff]
        %s626 = scalar_lea.vmem [#allocation4], 128
        %v627 = vld [vmem:[%s626] sm:$0xff]
        %v628 = vld [vmem:[%s626 + $0x8] sm:$0xff]
        %v629 = vld [vmem:[%s626 + $0x10] sm:$0xff]
        %v630 = vld [vmem:[%s626 + $0x18] sm:$0xff]
        %v631 = vld [vmem:[%s626 + $0x20] sm:$0xff]
        %v632 = vld [vmem:[%s626 + $0x28] sm:$0xff]
        %v633 = vld [vmem:[%s626 + $0x30] sm:$0xff]
        %v634 = vld [vmem:[%s626 + $0x38] sm:$0xff]
        %v635 = vld [vmem:[%s626 + $0x40] sm:$0xff]
        %v636 = vld [vmem:[%s626 + $0x48] sm:$0xff]
        %v637 = vld [vmem:[%s626 + $0x50] sm:$0xff]
        %v638 = vld [vmem:[%s626 + $0x58] sm:$0xff]
        %v639 = vld [vmem:[%s626 + $0x60] sm:$0xff]
        %v640 = vld [vmem:[%s626 + $0x68] sm:$0xff]
        %v641 = vld [vmem:[%s626 + $0x70] sm:$0xff]
        %v642 = vld [vmem:[%s626 + $0x78] sm:$0xff]
        %643 = vmatprep.subr.mxu0 0.0
        %644 = vmatpush1.msra.mxu0 %v627
        %645 = vmatprep.subr.mxu0 0.0
        %646 = vmatpush1.msra.mxu0 %v628
        %647 = vmatprep.subr.mxu0 0.0
        %648 = vmatpush1.msra.mxu0 %v629
        %649 = vmatprep.subr.mxu0 0.0
        %650 = vmatpush1.msra.mxu0 %v630
        %651 = vmatprep.subr.mxu0 0.0
        %652 = vmatpush1.msra.mxu0 %v631
        %653 = vmatprep.subr.mxu0 0.0
        %654 = vmatpush1.msra.mxu0 %v632
        %655 = vmatprep.subr.mxu0 0.0
        %656 = vmatpush1.msra.mxu0 %v633
        %657 = vmatprep.subr.mxu0 0.0
        %658 = vmatpush1.msra.mxu0 %v634
        %659 = vmatprep.subr.mxu0 0.0
        %660 = vmatpush1.msra.mxu0 %v635
        %661 = vmatprep.subr.mxu0 0.0
        %662 = vmatpush1.msra.mxu0 %v636
        %663 = vmatprep.subr.mxu0 0.0
        %664 = vmatpush1.msra.mxu0 %v637
        %665 = vmatprep.subr.mxu0 0.0
        %666 = vmatpush1.msra.mxu0 %v638
        %667 = vmatprep.subr.mxu0 0.0
        %668 = vmatpush1.msra.mxu0 %v639
        %669 = vmatprep.subr.mxu0 0.0
        %670 = vmatpush1.msra.mxu0 %v640
        %671 = vmatprep.subr.mxu0 0.0
        %672 = vmatpush1.msra.mxu0 %v641
        %673 = vmatprep.subr.mxu0 0.0
        %674 = vmatpush1.msra.mxu0 %v642
        %675 = vmatprep.subr.mxu0 0.0
        %676 = vmatpush1.msra.mxu0 0.0
        %677 = vmatprep.subr.mxu0 0.0
        %678 = vmatpush1.msra.mxu0 0.0
        %679 = vmatprep.subr.mxu0 0.0
        %680 = vmatpush1.msra.mxu0 0.0
        %681 = vmatprep.subr.mxu0 0.0
        %682 = vmatpush1.msra.mxu0 0.0
        %683 = vmatprep.subr.mxu0 0.0
        %684 = vmatpush1.msra.mxu0 0.0
        %685 = vmatprep.subr.mxu0 0.0
        %686 = vmatpush1.msra.mxu0 0.0
        %687 = vmatprep.subr.mxu0 0.0
        %688 = vmatpush1.msra.mxu0 0.0
        %689 = vmatprep.subr.mxu0 0.0
        %690 = vmatpush1.msra.mxu0 0.0
        %691 = vmatprep.subr.mxu0 0.0
        %692 = vmatpush1.msra.mxu0 0.0
        %693 = vmatprep.subr.mxu0 0.0
        %694 = vmatpush1.msra.mxu0 0.0
        %695 = vmatprep.subr.mxu0 0.0
        %696 = vmatpush1.msra.mxu0 0.0
        %697 = vmatprep.subr.mxu0 0.0
        %698 = vmatpush1.msra.mxu0 0.0
        %699 = vmatprep.subr.mxu0 0.0
        %700 = vmatpush1.msra.mxu0 0.0
        %701 = vmatprep.subr.mxu0 0.0
        %702 = vmatpush1.msra.mxu0 0.0
        %703 = vmatprep.subr.mxu0 0.0
        %704 = vmatpush1.msra.mxu0 0.0
        %705 = vmatprep.subr.mxu0 0.0
        %706 = vmatpush1.msra.mxu0 0.0
        %707 = vmatprep.mubr.f32.mxu0 0.0
        %708 = vmatmul.mubr.f32.gmra.mrb[0].mxu0 %v624
        %v709 = vpop.f32.mrb[0].mxu0
        %v710 = vadd.f32 0.0, %v709
        %v711 = vpop.f32.mrb[0].mxu0
        %712 = vmatprep.mubr.f32.mxu0 0.0
        %713 = vmatmul.mubr.f32.gmra.mrb[0].mxu0 %v625
        %v714 = vpop.f32.mrb[0].mxu0
        %v715 = vadd.f32 0.0, %v714
        %v716 = vpop.f32.mrb[0].mxu0
        %717 = vdwg.mxu0
        %718 = vmatprep.subr.mxu0 0.0
        %719 = vmatpush1.msra.mxu0 %v608
        %720 = vmatprep.subr.mxu0 0.0
        %721 = vmatpush1.msra.mxu0 %v609
        %722 = vmatprep.subr.mxu0 0.0
        %723 = vmatpush1.msra.mxu0 %v610
        %724 = vmatprep.subr.mxu0 0.0
        %725 = vmatpush1.msra.mxu0 %v611
        %726 = vmatprep.subr.mxu0 0.0
        %727 = vmatpush1.msra.mxu0 %v612
        %728 = vmatprep.subr.mxu0 0.0
        %729 = vmatpush1.msra.mxu0 %v613
        %730 = vmatprep.subr.mxu0 0.0
        %731 = vmatpush1.msra.mxu0 %v614
        %732 = vmatprep.subr.mxu0 0.0
        %733 = vmatpush1.msra.mxu0 %v615
        %734 = vmatprep.subr.mxu0 0.0
        %735 = vmatpush1.msra.mxu0 %v616
        %736 = vmatprep.subr.mxu0 0.0
        %737 = vmatpush1.msra.mxu0 %v617
        %738 = vmatprep.subr.mxu0 0.0
        %739 = vmatpush1.msra.mxu0 %v618
        %740 = vmatprep.subr.mxu0 0.0
        %741 = vmatpush1.msra.mxu0 %v619
        %742 = vmatprep.subr.mxu0 0.0
        %743 = vmatpush1.msra.mxu0 %v620
        %744 = vmatprep.subr.mxu0 0.0
        %745 = vmatpush1.msra.mxu0 %v621
        %746 = vmatprep.subr.mxu0 0.0
        %747 = vmatpush1.msra.mxu0 %v622
        %748 = vmatprep.subr.mxu0 0.0
        %749 = vmatpush1.msra.mxu0 %v623
        %750 = vmatprep.subr.mxu0 0.0
        %751 = vmatpush1.msra.mxu0 0.0
        %752 = vmatprep.subr.mxu0 0.0
        %753 = vmatpush1.msra.mxu0 0.0
        %754 = vmatprep.subr.mxu0 0.0
        %755 = vmatpush1.msra.mxu0 0.0
        %756 = vmatprep.subr.mxu0 0.0
        %757 = vmatpush1.msra.mxu0 0.0
        %758 = vmatprep.subr.mxu0 0.0
        %759 = vmatpush1.msra.mxu0 0.0
        %760 = vmatprep.subr.mxu0 0.0
        %761 = vmatpush1.msra.mxu0 0.0
        %762 = vmatprep.subr.mxu0 0.0
        %763 = vmatpush1.msra.mxu0 0.0
        %764 = vmatprep.subr.mxu0 0.0
        %765 = vmatpush1.msra.mxu0 0.0
        %766 = vmatprep.subr.mxu0 0.0
        %767 = vmatpush1.msra.mxu0 0.0
        %768 = vmatprep.subr.mxu0 0.0
        %769 = vmatpush1.msra.mxu0 0.0
        %770 = vmatprep.subr.mxu0 0.0
        %771 = vmatpush1.msra.mxu0 0.0
        %772 = vmatprep.subr.mxu0 0.0
        %773 = vmatpush1.msra.mxu0 0.0
        %774 = vmatprep.subr.mxu0 0.0
        %775 = vmatpush1.msra.mxu0 0.0
        %776 = vmatprep.subr.mxu0 0.0
        %777 = vmatpush1.msra.mxu0 0.0
        %778 = vmatprep.subr.mxu0 0.0
        %779 = vmatpush1.msra.mxu0 0.0
        %780 = vmatprep.subr.mxu0 0.0
        %781 = vmatpush1.msra.mxu0 0.0
        %782 = vmatprep.mubr.f32.mxu0 0.0
        %783 = vmatmul.mubr.f32.gmra.mrb[0].mxu0 %v606
        %v784 = vpop.f32.mrb[0].mxu0
        %v785 = vadd.f32 %v710, %v784
        %v786 = vpop.f32.mrb[0].mxu0
        %787 = vmatprep.mubr.f32.mxu0 0.0
        %788 = vmatmul.mubr.f32.gmra.mrb[0].mxu0 %v607
        %v789 = vpop.f32.mrb[0].mxu0
        %v790 = vadd.f32 %v715, %v789
        %v791 = vpop.f32.mrb[0].mxu0
        %792 = vdwg.mxu0
        %v793 = vld [vmem:[#allocation2 + $0x2] sm:$0xff]
        %v794 = vld [vmem:[#allocation2 + $0xa] sm:$0xff]
        %s795 = scalar_lea.vmem [#allocation4], 256
        %v796 = vld [vmem:[%s795] sm:$0xff]
        %v797 = vld [vmem:[%s795 + $0x8] sm:$0xff]
        %v798 = vld [vmem:[%s795 + $0x10] sm:$0xff]
        %v799 = vld [vmem:[%s795 + $0x18] sm:$0xff]
        %v800 = vld [vmem:[%s795 + $0x20] sm:$0xff]
        %v801 = vld [vmem:[%s795 + $0x28] sm:$0xff]
        %v802 = vld [vmem:[%s795 + $0x30] sm:$0xff]
        %v803 = vld [vmem:[%s795 + $0x38] sm:$0xff]
        %v804 = vld [vmem:[%s795 + $0x40] sm:$0xff]
        %v805 = vld [vmem:[%s795 + $0x48] sm:$0xff]
        %v806 = vld [vmem:[%s795 + $0x50] sm:$0xff]
        %v807 = vld [vmem:[%s795 + $0x58] sm:$0xff]
        %v808 = vld [vmem:[%s795 + $0x60] sm:$0xff]
        %v809 = vld [vmem:[%s795 + $0x68] sm:$0xff]
        %v810 = vld [vmem:[%s795 + $0x70] sm:$0xff]
        %v811 = vld [vmem:[%s795 + $0x78] sm:$0xff]
        %812 = vmatprep.subr.mxu0 0.0
        %813 = vmatpush1.msra.mxu0 %v796
        %814 = vmatprep.subr.mxu0 0.0
        %815 = vmatpush1.msra.mxu0 %v797
        %816 = vmatprep.subr.mxu0 0.0
        %817 = vmatpush1.msra.mxu0 %v798
        %818 = vmatprep.subr.mxu0 0.0
        %819 = vmatpush1.msra.mxu0 %v799
        %820 = vmatprep.subr.mxu0 0.0
        %821 = vmatpush1.msra.mxu0 %v800
        %822 = vmatprep.subr.mxu0 0.0
        %823 = vmatpush1.msra.mxu0 %v801
        %824 = vmatprep.subr.mxu0 0.0
        %825 = vmatpush1.msra.mxu0 %v802
        %826 = vmatprep.subr.mxu0 0.0
        %827 = vmatpush1.msra.mxu0 %v803
        %828 = vmatprep.subr.mxu0 0.0
        %829 = vmatpush1.msra.mxu0 %v804
        %830 = vmatprep.subr.mxu0 0.0
        %831 = vmatpush1.msra.mxu0 %v805
        %832 = vmatprep.subr.mxu0 0.0
        %833 = vmatpush1.msra.mxu0 %v806
        %834 = vmatprep.subr.mxu0 0.0
        %835 = vmatpush1.msra.mxu0 %v807
        %836 = vmatprep.subr.mxu0 0.0
        %837 = vmatpush1.msra.mxu0 %v808
        %838 = vmatprep.subr.mxu0 0.0
        %839 = vmatpush1.msra.mxu0 %v809
        %840 = vmatprep.subr.mxu0 0.0
        %841 = vmatpush1.msra.mxu0 %v810
        %842 = vmatprep.subr.mxu0 0.0
        %843 = vmatpush1.msra.mxu0 %v811
        %844 = vmatprep.subr.mxu0 0.0
        %845 = vmatpush1.msra.mxu0 0.0
        %846 = vmatprep.subr.mxu0 0.0
        %847 = vmatpush1.msra.mxu0 0.0
        %848 = vmatprep.subr.mxu0 0.0
        %849 = vmatpush1.msra.mxu0 0.0
        %850 = vmatprep.subr.mxu0 0.0
        %851 = vmatpush1.msra.mxu0 0.0
        %852 = vmatprep.subr.mxu0 0.0
        %853 = vmatpush1.msra.mxu0 0.0
        %854 = vmatprep.subr.mxu0 0.0
        %855 = vmatpush1.msra.mxu0 0.0
        %856 = vmatprep.subr.mxu0 0.0
        %857 = vmatpush1.msra.mxu0 0.0
        %858 = vmatprep.subr.mxu0 0.0
        %859 = vmatpush1.msra.mxu0 0.0
        %860 = vmatprep.subr.mxu0 0.0
        %861 = vmatpush1.msra.mxu0 0.0
        %862 = vmatprep.subr.mxu0 0.0
        %863 = vmatpush1.msra.mxu0 0.0
        %864 = vmatprep.subr.mxu0 0.0
        %865 = vmatpush1.msra.mxu0 0.0
        %866 = vmatprep.subr.mxu0 0.0
        %867 = vmatpush1.msra.mxu0 0.0
        %868 = vmatprep.subr.mxu0 0.0
        %869 = vmatpush1.msra.mxu0 0.0
        %870 = vmatprep.subr.mxu0 0.0
        %871 = vmatpush1.msra.mxu0 0.0
        %872 = vmatprep.subr.mxu0 0.0
        %873 = vmatpush1.msra.mxu0 0.0
        %874 = vmatprep.subr.mxu0 0.0
        %875 = vmatpush1.msra.mxu0 0.0
        %876 = vmatprep.mubr.f32.mxu0 0.0
        %877 = vmatmul.mubr.f32.gmra.mrb[0].mxu0 %v793
        %v878 = vpop.f32.mrb[0].mxu0
        %v879 = vadd.f32 0.0, %v878
        %v880 = vpop.f32.mrb[0].mxu0
        %881 = vmatprep.mubr.f32.mxu0 0.0
        %882 = vmatmul.mubr.f32.gmra.mrb[0].mxu0 %v794
        %v883 = vpop.f32.mrb[0].mxu0
        %v884 = vadd.f32 0.0, %v883
        %v885 = vpop.f32.mrb[0].mxu0
        %886 = vdwg.mxu0
        %v887 = vadd.f32 %v785, %v879
        %v888 = vadd.f32 %v790, %v884
        %v889 = vld [vmem:[%s5] sm:$0x1]
        %v891 = vlaneseq
        %v892 = vshrl.u32 %v891, 7
        %v893 = vsub.s32 0, %v892
        %v894 = vrot.slane %v889, %v893
        %v896 = vadd.f32 %v887, %v894
        %v897 = vadd.f32 %v888, %v894
        %v898 = vmax.f32 %v896, 0.0
        %v899 = vmax.f32 %v897, 0.0
        %900 = vst [vmem:[#allocation3 + $0x1] sm:$0xff] %v898
        %901 = vst [vmem:[#allocation3 + $0x9] sm:$0xff] %v899
        %v902 = vld [vmem:[#allocation3] sm:$0xff]
        %v903 = vld [vmem:[#allocation3 + $0x8] sm:$0xff]
        %v904 = vld [vmem:[#allocation6] sm:$0xff]
        %v905 = vld [vmem:[#allocation6 + $0x8] sm:$0xff]
        %v906 = vld [vmem:[#allocation6 + $0x10] sm:$0xff]
        %v907 = vld [vmem:[#allocation6 + $0x18] sm:$0xff]
        %v908 = vld [vmem:[#allocation6 + $0x20] sm:$0xff]
        %v909 = vld [vmem:[#allocation6 + $0x28] sm:$0xff]
        %v910 = vld [vmem:[#allocation6 + $0x30] sm:$0xff]
        %v911 = vld [vmem:[#allocation6 + $0x38] sm:$0xff]
        %v912 = vld [vmem:[#allocation6 + $0x40] sm:$0xff]
        %v913 = vld [vmem:[#allocation6 + $0x48] sm:$0xff]
        %v914 = vld [vmem:[#allocation6 + $0x50] sm:$0xff]
        %v915 = vld [vmem:[#allocation6 + $0x58] sm:$0xff]
        %v916 = vld [vmem:[#allocation6 + $0x60] sm:$0xff]
        %v917 = vld [vmem:[#allocation6 + $0x68] sm:$0xff]
        %v918 = vld [vmem:[#allocation6 + $0x70] sm:$0xff]
        %v919 = vld [vmem:[#allocation6 + $0x78] sm:$0xff]
        %v920 = vld [vmem:[#allocation3 + $0x1] sm:$0xff]
        %v921 = vld [vmem:[#allocation3 + $0x9] sm:$0xff]
        %s922 = scalar_lea.vmem [#allocation6], 128
        %v923 = vld [vmem:[%s922] sm:$0xff]
        %v924 = vld [vmem:[%s922 + $0x8] sm:$0xff]
        %v925 = vld [vmem:[%s922 + $0x10] sm:$0xff]
        %v926 = vld [vmem:[%s922 + $0x18] sm:$0xff]
        %v927 = vld [vmem:[%s922 + $0x20] sm:$0xff]
        %v928 = vld [vmem:[%s922 + $0x28] sm:$0xff]
        %v929 = vld [vmem:[%s922 + $0x30] sm:$0xff]
        %v930 = vld [vmem:[%s922 + $0x38] sm:$0xff]
        %v931 = vld [vmem:[%s922 + $0x40] sm:$0xff]
        %v932 = vld [vmem:[%s922 + $0x48] sm:$0xff]
        %v933 = vld [vmem:[%s922 + $0x50] sm:$0xff]
        %v934 = vld [vmem:[%s922 + $0x58] sm:$0xff]
        %v935 = vld [vmem:[%s922 + $0x60] sm:$0xff]
        %v936 = vld [vmem:[%s922 + $0x68] sm:$0xff]
        %v937 = vld [vmem:[%s922 + $0x70] sm:$0xff]
        %v938 = vld [vmem:[%s922 + $0x78] sm:$0xff]
        %939 = vmatprep.subr.mxu0 0.0
        %940 = vmatpush1.msra.mxu0 %v923
        %941 = vmatprep.subr.mxu0 0.0
        %942 = vmatpush1.msra.mxu0 %v924
        %943 = vmatprep.subr.mxu0 0.0
        %944 = vmatpush1.msra.mxu0 %v925
        %945 = vmatprep.subr.mxu0 0.0
        %946 = vmatpush1.msra.mxu0 %v926
        %947 = vmatprep.subr.mxu0 0.0
        %948 = vmatpush1.msra.mxu0 %v927
        %949 = vmatprep.subr.mxu0 0.0
        %950 = vmatpush1.msra.mxu0 %v928
        %951 = vmatprep.subr.mxu0 0.0
        %952 = vmatpush1.msra.mxu0 %v929
        %953 = vmatprep.subr.mxu0 0.0
        %954 = vmatpush1.msra.mxu0 %v930
        %955 = vmatprep.subr.mxu0 0.0
        %956 = vmatpush1.msra.mxu0 %v931
        %957 = vmatprep.subr.mxu0 0.0
        %958 = vmatpush1.msra.mxu0 %v932
        %959 = vmatprep.subr.mxu0 0.0
        %960 = vmatpush1.msra.mxu0 %v933
        %961 = vmatprep.subr.mxu0 0.0
        %962 = vmatpush1.msra.mxu0 %v934
        %963 = vmatprep.subr.mxu0 0.0
        %964 = vmatpush1.msra.mxu0 %v935
        %965 = vmatprep.subr.mxu0 0.0
        %966 = vmatpush1.msra.mxu0 %v936
        %967 = vmatprep.subr.mxu0 0.0
        %968 = vmatpush1.msra.mxu0 %v937
        %969 = vmatprep.subr.mxu0 0.0
        %970 = vmatpush1.msra.mxu0 %v938
        %971 = vmatprep.subr.mxu0 0.0
        %972 = vmatpush1.msra.mxu0 0.0
        %973 = vmatprep.subr.mxu0 0.0
        %974 = vmatpush1.msra.mxu0 0.0
        %975 = vmatprep.subr.mxu0 0.0
        %976 = vmatpush1.msra.mxu0 0.0
        %977 = vmatprep.subr.mxu0 0.0
        %978 = vmatpush1.msra.mxu0 0.0
        %979 = vmatprep.subr.mxu0 0.0
        %980 = vmatpush1.msra.mxu0 0.0
        %981 = vmatprep.subr.mxu0 0.0
        %982 = vmatpush1.msra.mxu0 0.0
        %983 = vmatprep.subr.mxu0 0.0
        %984 = vmatpush1.msra.mxu0 0.0
        %985 = vmatprep.subr.mxu0 0.0
        %986 = vmatpush1.msra.mxu0 0.0
        %987 = vmatprep.subr.mxu0 0.0
        %988 = vmatpush1.msra.mxu0 0.0
        %989 = vmatprep.subr.mxu0 0.0
        %990 = vmatpush1.msra.mxu0 0.0
        %991 = vmatprep.subr.mxu0 0.0
        %992 = vmatpush1.msra.mxu0 0.0
        %993 = vmatprep.subr.mxu0 0.0
        %994 = vmatpush1.msra.mxu0 0.0
        %995 = vmatprep.subr.mxu0 0.0
        %996 = vmatpush1.msra.mxu0 0.0
        %997 = vmatprep.subr.mxu0 0.0
        %998 = vmatpush1.msra.mxu0 0.0
        %999 = vmatprep.subr.mxu0 0.0
        %1000 = vmatpush1.msra.mxu0 0.0
        %1001 = vmatprep.subr.mxu0 0.0
        %1002 = vmatpush1.msra.mxu0 0.0
        %1003 = vmatprep.mubr.f32.mxu0 0.0
        %1004 = vmatmul.mubr.f32.gmra.mrb[0].mxu0 %v920
        %v1005 = vpop.f32.mrb[0].mxu0
        %v1006 = vadd.f32 0.0, %v1005
        %v1007 = vpop.f32.mrb[0].mxu0
        %1008 = vmatprep.mubr.f32.mxu0 0.0
        %1009 = vmatmul.mubr.f32.gmra.mrb[0].mxu0 %v921
        %v1010 = vpop.f32.mrb[0].mxu0
        %v1011 = vadd.f32 0.0, %v1010
        %v1012 = vpop.f32.mrb[0].mxu0
        %1013 = vdwg.mxu0
        %1014 = vmatprep.subr.mxu0 0.0
        %1015 = vmatpush1.msra.mxu0 %v904
        %1016 = vmatprep.subr.mxu0 0.0
        %1017 = vmatpush1.msra.mxu0 %v905
        %1018 = vmatprep.subr.mxu0 0.0
        %1019 = vmatpush1.msra.mxu0 %v906
        %1020 = vmatprep.subr.mxu0 0.0
        %1021 = vmatpush1.msra.mxu0 %v907
        %1022 = vmatprep.subr.mxu0 0.0
        %1023 = vmatpush1.msra.mxu0 %v908
        %1024 = vmatprep.subr.mxu0 0.0
        %1025 = vmatpush1.msra.mxu0 %v909
        %1026 = vmatprep.subr.mxu0 0.0
        %1027 = vmatpush1.msra.mxu0 %v910
        %1028 = vmatprep.subr.mxu0 0.0
        %1029 = vmatpush1.msra.mxu0 %v911
        %1030 = vmatprep.subr.mxu0 0.0
        %1031 = vmatpush1.msra.mxu0 %v912
        %1032 = vmatprep.subr.mxu0 0.0
        %1033 = vmatpush1.msra.mxu0 %v913
        %1034 = vmatprep.subr.mxu0 0.0
        %1035 = vmatpush1.msra.mxu0 %v914
        %1036 = vmatprep.subr.mxu0 0.0
        %1037 = vmatpush1.msra.mxu0 %v915
        %1038 = vmatprep.subr.mxu0 0.0
        %1039 = vmatpush1.msra.mxu0 %v916
        %1040 = vmatprep.subr.mxu0 0.0
        %1041 = vmatpush1.msra.mxu0 %v917
        %1042 = vmatprep.subr.mxu0 0.0
        %1043 = vmatpush1.msra.mxu0 %v918
        %1044 = vmatprep.subr.mxu0 0.0
        %1045 = vmatpush1.msra.mxu0 %v919
        %1046 = vmatprep.subr.mxu0 0.0
        %1047 = vmatpush1.msra.mxu0 0.0
        %1048 = vmatprep.subr.mxu0 0.0
        %1049 = vmatpush1.msra.mxu0 0.0
        %1050 = vmatprep.subr.mxu0 0.0
        %1051 = vmatpush1.msra.mxu0 0.0
        %1052 = vmatprep.subr.mxu0 0.0
        %1053 = vmatpush1.msra.mxu0 0.0
        %1054 = vmatprep.subr.mxu0 0.0
        %1055 = vmatpush1.msra.mxu0 0.0
        %1056 = vmatprep.subr.mxu0 0.0
        %1057 = vmatpush1.msra.mxu0 0.0
        %1058 = vmatprep.subr.mxu0 0.0
        %1059 = vmatpush1.msra.mxu0 0.0
        %1060 = vmatprep.subr.mxu0 0.0
        %1061 = vmatpush1.msra.mxu0 0.0
        %1062 = vmatprep.subr.mxu0 0.0
        %1063 = vmatpush1.msra.mxu0 0.0
        %1064 = vmatprep.subr.mxu0 0.0
        %1065 = vmatpush1.msra.mxu0 0.0
        %1066 = vmatprep.subr.mxu0 0.0
        %1067 = vmatpush1.msra.mxu0 0.0
        %1068 = vmatprep.subr.mxu0 0.0
        %1069 = vmatpush1.msra.mxu0 0.0
        %1070 = vmatprep.subr.mxu0 0.0
        %1071 = vmatpush1.msra.mxu0 0.0
        %1072 = vmatprep.subr.mxu0 0.0
        %1073 = vmatpush1.msra.mxu0 0.0
        %1074 = vmatprep.subr.mxu0 0.0
        %1075 = vmatpush1.msra.mxu0 0.0
        %1076 = vmatprep.subr.mxu0 0.0
        %1077 = vmatpush1.msra.mxu0 0.0
        %1078 = vmatprep.mubr.f32.mxu0 0.0
        %1079 = vmatmul.mubr.f32.gmra.mrb[0].mxu0 %v902
        %v1080 = vpop.f32.mrb[0].mxu0
        %v1081 = vadd.f32 %v1006, %v1080
        %v1082 = vpop.f32.mrb[0].mxu0
        %1083 = vmatprep.mubr.f32.mxu0 0.0
        %1084 = vmatmul.mubr.f32.gmra.mrb[0].mxu0 %v903
        %v1085 = vpop.f32.mrb[0].mxu0
        %v1086 = vadd.f32 %v1011, %v1085
        %v1087 = vpop.f32.mrb[0].mxu0
        %1088 = vdwg.mxu0
        %v1089 = vld [vmem:[#allocation3 + $0x2] sm:$0xff]
        %v1090 = vld [vmem:[#allocation3 + $0xa] sm:$0xff]
        %s1091 = scalar_lea.vmem [#allocation6], 256
        %v1092 = vld [vmem:[%s1091] sm:$0xff]
        %v1093 = vld [vmem:[%s1091 + $0x8] sm:$0xff]
        %v1094 = vld [vmem:[%s1091 + $0x10] sm:$0xff]
        %v1095 = vld [vmem:[%s1091 + $0x18] sm:$0xff]
        %v1096 = vld [vmem:[%s1091 + $0x20] sm:$0xff]
        %v1097 = vld [vmem:[%s1091 + $0x28] sm:$0xff]
        %v1098 = vld [vmem:[%s1091 + $0x30] sm:$0xff]
        %v1099 = vld [vmem:[%s1091 + $0x38] sm:$0xff]
        %v1100 = vld [vmem:[%s1091 + $0x40] sm:$0xff]
        %v1101 = vld [vmem:[%s1091 + $0x48] sm:$0xff]
        %v1102 = vld [vmem:[%s1091 + $0x50] sm:$0xff]
        %v1103 = vld [vmem:[%s1091 + $0x58] sm:$0xff]
        %v1104 = vld [vmem:[%s1091 + $0x60] sm:$0xff]
        %v1105 = vld [vmem:[%s1091 + $0x68] sm:$0xff]
        %v1106 = vld [vmem:[%s1091 + $0x70] sm:$0xff]
        %v1107 = vld [vmem:[%s1091 + $0x78] sm:$0xff]
        %1108 = vmatprep.subr.mxu0 0.0
        %1109 = vmatpush1.msra.mxu0 %v1092
        %1110 = vmatprep.subr.mxu0 0.0
        %1111 = vmatpush1.msra.mxu0 %v1093
        %1112 = vmatprep.subr.mxu0 0.0
        %1113 = vmatpush1.msra.mxu0 %v1094
        %1114 = vmatprep.subr.mxu0 0.0
        %1115 = vmatpush1.msra.mxu0 %v1095
        %1116 = vmatprep.subr.mxu0 0.0
        %1117 = vmatpush1.msra.mxu0 %v1096
        %1118 = vmatprep.subr.mxu0 0.0
        %1119 = vmatpush1.msra.mxu0 %v1097
        %1120 = vmatprep.subr.mxu0 0.0
        %1121 = vmatpush1.msra.mxu0 %v1098
        %1122 = vmatprep.subr.mxu0 0.0
        %1123 = vmatpush1.msra.mxu0 %v1099
        %1124 = vmatprep.subr.mxu0 0.0
        %1125 = vmatpush1.msra.mxu0 %v1100
        %1126 = vmatprep.subr.mxu0 0.0
        %1127 = vmatpush1.msra.mxu0 %v1101
        %1128 = vmatprep.subr.mxu0 0.0
        %1129 = vmatpush1.msra.mxu0 %v1102
        %1130 = vmatprep.subr.mxu0 0.0
        %1131 = vmatpush1.msra.mxu0 %v1103
        %1132 = vmatprep.subr.mxu0 0.0
        %1133 = vmatpush1.msra.mxu0 %v1104
        %1134 = vmatprep.subr.mxu0 0.0
        %1135 = vmatpush1.msra.mxu0 %v1105
        %1136 = vmatprep.subr.mxu0 0.0
        %1137 = vmatpush1.msra.mxu0 %v1106
        %1138 = vmatprep.subr.mxu0 0.0
        %1139 = vmatpush1.msra.mxu0 %v1107
        %1140 = vmatprep.subr.mxu0 0.0
        %1141 = vmatpush1.msra.mxu0 0.0
        %1142 = vmatprep.subr.mxu0 0.0
        %1143 = vmatpush1.msra.mxu0 0.0
        %1144 = vmatprep.subr.mxu0 0.0
        %1145 = vmatpush1.msra.mxu0 0.0
        %1146 = vmatprep.subr.mxu0 0.0
        %1147 = vmatpush1.msra.mxu0 0.0
        %1148 = vmatprep.subr.mxu0 0.0
        %1149 = vmatpush1.msra.mxu0 0.0
        %1150 = vmatprep.subr.mxu0 0.0
        %1151 = vmatpush1.msra.mxu0 0.0
        %1152 = vmatprep.subr.mxu0 0.0
        %1153 = vmatpush1.msra.mxu0 0.0
        %1154 = vmatprep.subr.mxu0 0.0
        %1155 = vmatpush1.msra.mxu0 0.0
        %1156 = vmatprep.subr.mxu0 0.0
        %1157 = vmatpush1.msra.mxu0 0.0
        %1158 = vmatprep.subr.mxu0 0.0
        %1159 = vmatpush1.msra.mxu0 0.0
        %1160 = vmatprep.subr.mxu0 0.0
        %1161 = vmatpush1.msra.mxu0 0.0
        %1162 = vmatprep.subr.mxu0 0.0
        %1163 = vmatpush1.msra.mxu0 0.0
        %1164 = vmatprep.subr.mxu0 0.0
        %1165 = vmatpush1.msra.mxu0 0.0
        %1166 = vmatprep.subr.mxu0 0.0
        %1167 = vmatpush1.msra.mxu0 0.0
        %1168 = vmatprep.subr.mxu0 0.0
        %1169 = vmatpush1.msra.mxu0 0.0
        %1170 = vmatprep.subr.mxu0 0.0
        %1171 = vmatpush1.msra.mxu0 0.0
        %1172 = vmatprep.mubr.f32.mxu0 0.0
        %1173 = vmatmul.mubr.f32.gmra.mrb[0].mxu0 %v1089
        %v1174 = vpop.f32.mrb[0].mxu0
        %v1175 = vadd.f32 0.0, %v1174
        %v1176 = vpop.f32.mrb[0].mxu0
        %1177 = vmatprep.mubr.f32.mxu0 0.0
        %1178 = vmatmul.mubr.f32.gmra.mrb[0].mxu0 %v1090
        %v1179 = vpop.f32.mrb[0].mxu0
        %v1180 = vadd.f32 0.0, %v1179
        %v1181 = vpop.f32.mrb[0].mxu0
        %1182 = vdwg.mxu0
        %v1183 = vadd.f32 %v1081, %v1175
        %v1184 = vadd.f32 %v1086, %v1180
        %v1185 = vld [vmem:[%s7] sm:$0x1]
        %v1187 = vlaneseq
        %v1188 = vshrl.u32 %v1187, 7
        %v1189 = vsub.s32 0, %v1188
        %v1190 = vrot.slane %v1185, %v1189
        %v1192 = vadd.f32 %v1183, %v1190
        %v1193 = vadd.f32 %v1184, %v1190
        %v1194 = vmax.f32 %v1192, 0.0
        %v1195 = vmax.f32 %v1193, 0.0
        %1196 = vst [vmem:[%s352] sm:$0xff] %v1194
        %1197 = vst [vmem:[%s352 + $0x8] sm:$0xff] %v1195
        %p1198 = scmp.lt.s32.totalorder %s21, 1
        %s1199 = scalar_select %p1198, %s21, 1
        %s1200 = smul.addr %s1199, 2
        %s1201 = smul.addr %s1200, 8
        %s1202 = scalar_lea.vmem %s8, %s1201
        // Predicated region
        $region61: #{upconv_forward.1} parent=51 // pred_check
          %p1203 = pneg %p217
        $region62: #{upconv_forward.1} parent=51 // pred_check_branch
          %1205 = sbr.rel (%p1203) target = $region64
        $region63: #{upconv_forward.1} parent=51 // pred_region
          _
        $region64: #{upconv_forward.1} parent=51 // pred_fallthru
          _
      $region52: #{upconv_forward.1} parent=5 // pred_fallthru
        _
      %p1206 = scmp.le.s32.totalorder 2, %s16
      // Predicated region
      $region65: #{upconv_forward.1} parent=5 // pred_check
        %p1207 = pneg %p1206
      $region66: #{upconv_forward.1} parent=5 // pred_check_branch
        %1209 = sbr.rel (%p1207) target = $region68
      $region67: #{upconv_forward.1} parent=5 // pred_region
        %s1210 = ssub.s32 %s16, 2
        // Predicated region
        $region69: #{upconv_forward.1} parent=67 // pred_check
          %p1211 = pneg %p223
        $region70: #{upconv_forward.1} parent=67 // pred_check_branch
          %1213 = sbr.rel (%p1211) target = $region72
        $region71: #{upconv_forward.1} parent=67 // pred_region
          %p1214 = scmp.lt.s32.totalorder %s22, 1
          %s1215 = scalar_select %p1214, %s22, 1
          %s1216 = smul.addr %s1215, 2
          %s1217 = smul.addr %s1216, 8
          %s1218 = scalar_lea.vmem %s8, %s1217
        $region72: #{upconv_forward.1} parent=67 // pred_fallthru
          _
      $region68: #{upconv_forward.1} parent=5 // pred_fallthru
        _
    $region6: #{upconv_forward.1} parent=1 // loop_footer
      %s20 = sadd.s32 1, %s16
    $region7: #{upconv_forward.1} parent=1 // loop_footer_branch
      %15 = sbr.rel target = $region3
    $region8: #{upconv_forward.1} parent=1 // loop_exit
      _
    %1219 = vsyncpa [#allocation5], 1
    %s1220 = scalar_lea.sflag [#allocation5], 1
    %1221 = vsyncpa %s1220, 1
    %1222 = vsyncpa [#allocation7], 1

</llo_original>
